<compile_context>
chip_gen: v6e
topology: v6e:2x2x1
jax: 0.10.0
libtpu: 0.0.40
codegen_flags: <defaults>
</compile_context>

<pallas_src>
import functools

import jax
import jax.numpy as jnp
from jax.experimental import pallas as pl
from jax.experimental.pallas import tpu as pltpu


def _round_up(x, m):
    return (x + m - 1) // m * m


def cgmlp_kernel(x_ref, halo_ref, w1_ref, b1_ref, nw_ref, nb_ref, cw_ref, cb_ref,
                 wl_ref, bl_ref, w2_ref, b2_ref, o_ref, *,
                 n_ch: int, ksize: int, tile_t: int, pad_r: int, seq_len: int,
                 needs_tail_mask: bool, approx_gelu: bool):
    pad = (ksize - 1) // 2
    t_idx = pl.program_id(1)
    row0 = t_idx * tile_t

    def layer_norm(v):  # channel LayerNorm, eps=1e-5, single centering pass
        mean = jnp.mean(v, axis=-1, keepdims=True)
        cen = v - mean
        var = jnp.mean(cen * cen, axis=-1, keepdims=True)
        return cen * jax.lax.rsqrt(var + 1e-5) * nw_ref[...] + nb_ref[...]

    # ---- fused channel_proj1: one MXU pass, f32 accumulation -----------------
    x_cur = x_ref[0]                                          # (TILE_T, size) bf16
    h = jnp.dot(x_cur, w1_ref[...], preferred_element_type=jnp.float32) + b1_ref[...]
    h = jax.nn.gelu(h, approximate=approx_gelu)               # tanh -> EUP slot
    x_r = h[:, :n_ch]                                         # residual half
    g_cur = layer_norm(h[:, n_ch:])                           # gate half

    if needs_tail_mask:  # zero conv inputs past the real sequence end
        r_c = jax.lax.broadcasted_iota(jnp.int32, (tile_t, 1), 0)
        g_cur = jnp.where(row0 + r_c < seq_len, g_cur, 0.0)

    # ---- conv halo: tiny (2*pad_r, size) slab, one small dot -----------------
    if pad > 0:
        hh = jnp.dot(halo_ref[0, 0], w1_ref[...], preferred_element_type=jnp.float32)
        hh = jax.nn.gelu(hh + b1_ref[...], approximate=approx_gelu)
        g_halo = layer_norm(hh[:, n_ch:])                     # (2*pad_r, n_ch)
        # prev-halo rows are all < row0; valid iff this is not the first tile
        g_lo = jnp.where(t_idx > 0, g_halo[:pad], 0.0)
        r_h = jax.lax.broadcasted_iota(jnp.int32, (pad, 1), 0)
        g_hi = jnp.where(row0 + tile_t + r_h < seq_len,
                         g_halo[pad_r:pad_r + pad], 0.0)
        x_ext = jnp.concatenate([g_lo, g_cur, g_hi], axis=0)  # (TILE_T + 2*pad, n_ch)
    else:
        x_ext = g_cur

    # ---- depthwise conv along T (cross-correlation, groups=n_ch) -------------
    # TODO(synk): pltpu.roll-based windows would move these sublane shifts onto
    # the XLU slot; static slices kept for lowering robustness.
    acc = x_ext[0:tile_t, :] * cw_ref[0:1, :]
    for j in range(1, ksize):                                 # static unroll
        acc = acc + x_ext[j:j + tile_t, :] * cw_ref[j:j + 1, :]
    acc = acc + cb_ref[...]

    # Linear after conv (use_linear_after_conv=True); gate activation = identity.
    x_g = jnp.dot(acc.astype(jnp.bfloat16), wl_ref[...],
                  preferred_element_type=jnp.float32) + bl_ref[...]

    # ---- gating + channel_proj2 (dropout = identity in eval) -----------------
    gated = (x_r * x_g).astype(jnp.bfloat16)
    y = jnp.dot(gated, w2_ref[...], preferred_element_type=jnp.float32) + b2_ref[...]
    o_ref[0] = y.astype(o_ref.dtype)


def cgmlp_forward(x, params, *, kernel_size: int, tile_t=None,
                  out_dtype=jnp.float32, approx_gelu: bool = True,
                  vmem_limit_bytes=None):
    """x: (N, T, size) float32. params: dict (see make_params). -> (N, T, size)."""
    N, T, size = x.shape
    n_ch = params["w1"].shape[1] // 2
    k = kernel_size
    pad = (k - 1) // 2

    # Per-generation defaults: v5e/v6e have 128 MiB physical VMEM, v7x only 64.
    try:
        vmem_cap = pltpu.get_tpu_info().vmem_capacity_bytes
    except Exception:
        vmem_cap = 64 * 1024 * 1024          # conservative if the query fails
    small_vmem = vmem_cap < 100 * 1024 * 1024
    if tile_t is None:
        tile_t = 256 if small_vmem else 512
    if vmem_limit_bytes is None:
        vmem_limit_bytes = (48 if small_vmem else 96) * 1024 * 1024

    TILE_T = _round_up(min(tile_t, _round_up(T, 8)), 8)
    TILE_T = max(TILE_T, _round_up(max(pad, 1), 8))  # conv halo must fit one tile
    T_pad = _round_up(T, TILE_T)
    nt = T_pad // TILE_T
    pad_r = _round_up(max(pad, 1), 8)                # sublane-aligned halo slab

    x_b = x.astype(jnp.bfloat16)
    if T_pad != T:
        x_b = jnp.pad(x_b, ((0, 0), (0, T_pad - T), (0, 0)))

    # Pre-gathered halo slabs (one-time, wrapper side): rows [0, pad) hold the
    # pad rows preceding each tile, rows [pad_r, pad_r+pad) the pad rows
    # following it; out-of-range rows are zero.
    if pad > 0:
        lo_src = jnp.pad(x_b, ((0, 0), (pad, 0), (0, 0)))[:, :T_pad]
        halo_lo = lo_src.reshape(N, nt, TILE_T, size)[:, :, :pad, :]
        hi_src = jnp.pad(x_b, ((0, 0), (0, TILE_T), (0, 0)))[:, TILE_T:TILE_T + T_pad]
        halo_hi = hi_src.reshape(N, nt, TILE_T, size)[:, :, :pad, :]
        rpad = ((0, 0), (0, 0), (0, pad_r - pad), (0, 0))
        halo = jnp.concatenate([jnp.pad(halo_lo, rpad), jnp.pad(halo_hi, rpad)],
                               axis=2)              # (N, nt, 2*pad_r, size)
    else:
        halo = jnp.zeros((N, nt, 2 * pad_r, size), jnp.bfloat16)

    bf16, f32 = jnp.bfloat16, jnp.float32
    w1 = params["w1"].astype(bf16)
    wl = params["wl"].astype(bf16)
    w2 = params["w2"].astype(bf16)
    b1 = params["b1"].astype(f32)
    nw, nb = params["nw"].astype(f32), params["nb"].astype(f32)
    cw, cb = params["cw"].astype(f32), params["cb"].astype(f32)
    bl, b2 = params["bl"].astype(f32), params["b2"].astype(f32)
    weights = (w1, b1, nw, nb, cw, cb, wl, bl, w2, b2)

    kernel = functools.partial(
        cgmlp_kernel, n_ch=n_ch, ksize=k, tile_t=TILE_T, pad_r=pad_r,
        seq_len=T, needs_tail_mask=(T_pad != T), approx_gelu=approx_gelu)

    def run(single_buffer_weights):
        def resident(arr):  # whole array, constant index_map -> stays in VMEM
            ndim = arr.ndim
            if single_buffer_weights:
                return pl.BlockSpec(arr.shape, lambda n, t: (0,) * ndim,
                                    pipeline_mode=pl.Buffered(buffer_count=1))
            return pl.BlockSpec(arr.shape, lambda n, t: (0,) * ndim)

        grid_spec = pltpu.PrefetchScalarGridSpec(
            num_scalar_prefetch=0,
            grid=(N, nt),
            in_specs=[
                pl.BlockSpec((1, TILE_T, size), lambda n, t: (n, t, 0)),
                pl.BlockSpec((1, 1, 2 * pad_r, size), lambda n, t: (n, t, 0, 0)),
            ] + [resident(w) for w in weights],
            out_specs=pl.BlockSpec((1, TILE_T, size), lambda n, t: (n, t, 0)),
        )
        return pl.pallas_call(
            kernel,
            out_shape=jax.ShapeDtypeStruct((N, T_pad, size), out_dtype),
            grid_spec=grid_spec,
            compiler_params=pltpu.CompilerParams(
                dimension_semantics=("parallel", "parallel"),
                vmem_limit_bytes=vmem_limit_bytes),
        )(x_b, halo, *weights)

    try:
        out = run(True)
    except Exception:   # pl.Buffered(1) unsupported -> default double-buffering
        out = run(False)

    return out[:, :T, :] if T_pad != T else out


def reference_forward(x, params, *, kernel_size: int, approx_gelu: bool = False):
    """Pure-JAX f32 reference with PyTorch-equivalent semantics (exact GELU)."""
    n_ch = params["w1"].shape[1] // 2
    h = jax.nn.gelu(jnp.einsum("ntd,df->ntf", x, params["w1"]) + params["b1"],
                    approximate=approx_gelu)
    x_r, x_g = h[..., :n_ch], h[..., n_ch:]
    mean = jnp.mean(x_g, axis=-1, keepdims=True)
    var = jnp.mean((x_g - mean) ** 2, axis=-1, keepdims=True)
    x_g = (x_g - mean) / jnp.sqrt(var + 1e-5) * params["nw"] + params["nb"]
    pad = (kernel_size - 1) // 2
    xp = jnp.pad(x_g, ((0, 0), (pad, pad), (0, 0)))
    acc = sum(xp[:, j:j + x.shape[1], :] * params["cw"][j]
              for j in range(kernel_size)) + params["cb"]
    x_g = jnp.einsum("ntc,cd->ntd", acc, params["wl"]) + params["bl"]
    return jnp.einsum("ntc,cd->ntd", x_r * x_g, params["w2"]) + params["b2"]


def make_params(key, size, linear_units, kernel_size):
    n_ch = linear_units // 2
    ks = jax.random.split(key, 6)
    f32 = jnp.float32
    # Linear weights stored transposed as (in, out); PyTorch holds (out, in).
    w1 = jax.random.normal(ks[0], (size, linear_units), f32) * 0.05
    b1 = jax.random.normal(ks[1], (1, linear_units), f32) * 0.05
    # espnet_initialization_fn: conv weight ~ N(0, 1e-6), conv bias = 1
    cw = jax.random.normal(ks[2], (kernel_size, n_ch), f32) * 1e-6
    # linear-after-conv: weight ~ N(0, 1e-6), bias = 1
    wl = jax.random.normal(ks[3], (n_ch, n_ch), f32) * 1e-6
    w2 = jax.random.normal(ks[4], (n_ch, size), f32) * 0.05
    b2 = jax.random.normal(ks[5], (1, size), f32) * 0.05
    return dict(
        w1=w1, b1=b1,
        nw=jnp.ones((1, n_ch), f32), nb=jnp.zeros((1, n_ch), f32),
        cw=cw, cb=jnp.ones((1, n_ch), f32),
        wl=wl, bl=jnp.ones((1, n_ch), f32),
        w2=w2, b2=b2)


if __name__ == "__main__":
    # TODO(synk): dropout / gate_add / pos_emb / mask passthrough are
    # identity/None in eval and are not modeled inside the kernel.
    key = jax.random.PRNGKey(0)

    def check(N, T, size, linear_units, ksize, tile_t):
        kx, kp = jax.random.split(jax.random.fold_in(key, T))
        x = jax.random.normal(kx, (N, T, size), jnp.float32)
        params = make_params(kp, size, linear_units, ksize)
        out = cgmlp_forward(x, params, kernel_size=ksize, tile_t=tile_t)
        out = jax.block_until_ready(out)
        ref = reference_forward(x, params, kernel_size=ksize)   # exact-GELU spec
        assert out.shape == (N, T, size)
        err = jnp.max(jnp.abs(out - ref))
        assert jnp.allclose(out, ref, atol=2e-2, rtol=2e-2), f"mismatch, max err {err}"

    # Small, module-consistent config (single T tile).
    check(N=2, T=8, size=32, linear_units=64, ksize=3, tile_t=256)
    # Multi-tile T path: conv halo across tile boundaries + end-of-sequence
    # masking (T not a multiple of TILE_T).
    check(N=1, T=40, size=32, linear_units=64, ksize=5, tile_t=16)

    print("KERNEL_OK")
</pallas_src>

<mosaic_0001>
module attributes {stable_mosaic.version = 11 : i64} {
  func.func @cgmlp_kernel(%arg0: i32, %arg1: i32, %arg2: memref<1x8x32xbf16, #tpu.memory_space<vmem>>, %arg3: memref<1x1x16x32xbf16, #tpu.memory_space<vmem>>, %arg4: memref<32x64xbf16, #tpu.memory_space<vmem>>, %arg5: memref<1x64xf32, #tpu.memory_space<vmem>>, %arg6: memref<1x32xf32, #tpu.memory_space<vmem>>, %arg7: memref<1x32xf32, #tpu.memory_space<vmem>>, %arg8: memref<3x32xf32, #tpu.memory_space<vmem>>, %arg9: memref<1x32xf32, #tpu.memory_space<vmem>>, %arg10: memref<32x32xbf16, #tpu.memory_space<vmem>>, %arg11: memref<1x32xf32, #tpu.memory_space<vmem>>, %arg12: memref<32x32xbf16, #tpu.memory_space<vmem>>, %arg13: memref<1x32xf32, #tpu.memory_space<vmem>>, %arg14: memref<1x8x32xf32, #tpu.memory_space<vmem>>) attributes {dimension_semantics = [#tpu.dimension_semantics<parallel>, #tpu.dimension_semantics<parallel>], iteration_bounds = array<i64: 2, 1>, scalar_prefetch = 0 : i64, scratch_operands = 0 : i64, tpu.core_type = #tpu.core_type<tc>, window_params = [{transform_indices = @transform_0, window_bounds = array<i64: 1, 8, 32>}, {transform_indices = @transform_1, window_bounds = array<i64: 1, 1, 16, 32>}, {pipeline_mode = #tpu.pipeline_mode<synchronous>, transform_indices = @transform_2, window_bounds = array<i64: 32, 64>}, {pipeline_mode = #tpu.pipeline_mode<synchronous>, transform_indices = @transform_3, window_bounds = array<i64: 1, 64>}, {pipeline_mode = #tpu.pipeline_mode<synchronous>, transform_indices = @transform_4, window_bounds = array<i64: 1, 32>}, {pipeline_mode = #tpu.pipeline_mode<synchronous>, transform_indices = @transform_5, window_bounds = array<i64: 1, 32>}, {pipeline_mode = #tpu.pipeline_mode<synchronous>, transform_indices = @transform_6, window_bounds = array<i64: 3, 32>}, {pipeline_mode = #tpu.pipeline_mode<synchronous>, transform_indices = @transform_7, window_bounds = array<i64: 1, 32>}, {pipeline_mode = #tpu.pipeline_mode<synchronous>, transform_indices = @transform_8, window_bounds = array<i64: 32, 32>}, {pipeline_mode = #tpu.pipeline_mode<synchronous>, transform_indices = @transform_9, window_bounds = array<i64: 1, 32>}, {pipeline_mode = #tpu.pipeline_mode<synchronous>, transform_indices = @transform_10, window_bounds = array<i64: 32, 32>}, {pipeline_mode = #tpu.pipeline_mode<synchronous>, transform_indices = @transform_11, window_bounds = array<i64: 1, 32>}, {transform_indices = @transform_12, window_bounds = array<i64: 1, 8, 32>}]} {
    %c8_i32 = arith.constant 8 : i32
    %0 = arith.muli %arg1, %c8_i32 : i32
    %c0 = arith.constant 0 : index
    %c0_0 = arith.constant 0 : index
    %c0_1 = arith.constant 0 : index
    %1 = vector.load %arg2[%c0, %c0_0, %c0_1] : memref<1x8x32xbf16, #tpu.memory_space<vmem>>, vector<1x8x32xbf16>
    %2 = vector.shape_cast %1 : vector<1x8x32xbf16> to vector<8x32xbf16>
    %c0_2 = arith.constant 0 : index
    %c0_3 = arith.constant 0 : index
    %3 = vector.load %arg4[%c0_2, %c0_3] : memref<32x64xbf16, #tpu.memory_space<vmem>>, vector<32x64xbf16>
    %cst = arith.constant dense<0.000000e+00> : vector<8x64xf32>
    %4 = tpu.matmul %2, %3, %cst {dimension_numbers = #tpu.dot_dimension_numbers<[1], [0], [0], [1], [0, 0, 1, 1], [], []>} : vector<8x32xbf16>, vector<32x64xbf16>, vector<8x64xf32> -> vector<8x64xf32>
    %c0_4 = arith.constant 0 : index
    %c0_5 = arith.constant 0 : index
    %5 = vector.load %arg5[%c0_4, %c0_5] : memref<1x64xf32, #tpu.memory_space<vmem>>, vector<1x64xf32>
    %6 = vector.broadcast %5 : vector<1x64xf32> to vector<8x64xf32>
    %7 = arith.addf %4, %6 : vector<8x64xf32>
    %8 = arith.mulf %7, %7 : vector<8x64xf32>
    %9 = arith.mulf %7, %8 : vector<8x64xf32>
    %cst_6 = arith.constant 4.471500e-02 : f32
    %10 = vector.broadcast %cst_6 : f32 to vector<8x64xf32>
    %11 = arith.mulf %10, %9 : vector<8x64xf32>
    %12 = arith.addf %7, %11 : vector<8x64xf32>
    %cst_7 = arith.constant 0.797884583 : f32
    %13 = vector.broadcast %cst_7 : f32 to vector<8x64xf32>
    %14 = arith.mulf %13, %12 : vector<8x64xf32>
    %15 = math.tanh %14 : vector<8x64xf32>
    %cst_8 = arith.constant 1.000000e+00 : f32
    %16 = vector.broadcast %cst_8 : f32 to vector<8x64xf32>
    %17 = arith.addf %16, %15 : vector<8x64xf32>
    %cst_9 = arith.constant 5.000000e-01 : f32
    %18 = vector.broadcast %cst_9 : f32 to vector<8x64xf32>
    %19 = arith.mulf %18, %17 : vector<8x64xf32>
    %20 = arith.mulf %7, %19 : vector<8x64xf32>
    %21 = vector.extract_strided_slice %20 {offsets = [0, 0], sizes = [8, 32], strides = [1, 1]} : vector<8x64xf32> to vector<8x32xf32>
    %22 = vector.extract_strided_slice %20 {offsets = [0, 32], sizes = [8, 32], strides = [1, 1]} : vector<8x64xf32> to vector<8x32xf32>
    %cst_10 = arith.constant dense<0.000000e+00> : vector<8xf32>
    %23 = vector.multi_reduction <add>, %22, %cst_10 [1] : vector<8x32xf32> to vector<8xf32>
    %24 = vector.shape_cast %23 : vector<8xf32> to vector<8x1xf32>
    %cst_11 = arith.constant 3.200000e+01 : f32
    %25 = vector.broadcast %cst_11 : f32 to vector<8x1xf32>
    %26 = arith.divf %24, %25 : vector<8x1xf32>
    %27 = vector.broadcast %26 : vector<8x1xf32> to vector<8x32xf32>
    %28 = arith.subf %22, %27 : vector<8x32xf32>
    %29 = arith.mulf %28, %28 : vector<8x32xf32>
    %cst_12 = arith.constant dense<0.000000e+00> : vector<8xf32>
    %30 = vector.multi_reduction <add>, %29, %cst_12 [1] : vector<8x32xf32> to vector<8xf32>
    %31 = vector.shape_cast %30 : vector<8xf32> to vector<8x1xf32>
    %cst_13 = arith.constant 3.200000e+01 : f32
    %32 = vector.broadcast %cst_13 : f32 to vector<8x1xf32>
    %33 = arith.divf %31, %32 : vector<8x1xf32>
    %cst_14 = arith.constant 9.99999974E-6 : f32
    %34 = vector.broadcast %cst_14 : f32 to vector<8x1xf32>
    %35 = arith.addf %33, %34 : vector<8x1xf32>
    %36 = math.rsqrt %35 : vector<8x1xf32>
    %37 = vector.broadcast %36 : vector<8x1xf32> to vector<8x32xf32>
    %38 = arith.mulf %28, %37 : vector<8x32xf32>
    %c0_15 = arith.constant 0 : index
    %c0_16 = arith.constant 0 : index
    %39 = vector.load %arg6[%c0_15, %c0_16] : memref<1x32xf32, #tpu.memory_space<vmem>>, vector<1x32xf32>
    %40 = vector.broadcast %39 : vector<1x32xf32> to vector<8x32xf32>
    %41 = arith.mulf %38, %40 : vector<8x32xf32>
    %c0_17 = arith.constant 0 : index
    %c0_18 = arith.constant 0 : index
    %42 = vector.load %arg7[%c0_17, %c0_18] : memref<1x32xf32, #tpu.memory_space<vmem>>, vector<1x32xf32>
    %43 = vector.broadcast %42 : vector<1x32xf32> to vector<8x32xf32>
    %44 = arith.addf %41, %43 : vector<8x32xf32>
    %c0_19 = arith.constant 0 : index
    %c0_20 = arith.constant 0 : index
    %c0_21 = arith.constant 0 : index
    %c0_22 = arith.constant 0 : index
    %45 = vector.load %arg3[%c0_19, %c0_20, %c0_21, %c0_22] : memref<1x1x16x32xbf16, #tpu.memory_space<vmem>>, vector<1x1x16x32xbf16>
    %46 = vector.shape_cast %45 : vector<1x1x16x32xbf16> to vector<16x32xbf16>
    %c0_23 = arith.constant 0 : index
    %c0_24 = arith.constant 0 : index
    %47 = vector.load %arg4[%c0_23, %c0_24] : memref<32x64xbf16, #tpu.memory_space<vmem>>, vector<32x64xbf16>
    %cst_25 = arith.constant dense<0.000000e+00> : vector<16x64xf32>
    %48 = tpu.matmul %46, %47, %cst_25 {dimension_numbers = #tpu.dot_dimension_numbers<[1], [0], [0], [1], [0, 0, 1, 1], [], []>} : vector<16x32xbf16>, vector<32x64xbf16>, vector<16x64xf32> -> vector<16x64xf32>
    %c0_26 = arith.constant 0 : index
    %c0_27 = arith.constant 0 : index
    %49 = vector.load %arg5[%c0_26, %c0_27] : memref<1x64xf32, #tpu.memory_space<vmem>>, vector<1x64xf32>
    %50 = vector.broadcast %49 : vector<1x64xf32> to vector<16x64xf32>
    %51 = arith.addf %48, %50 : vector<16x64xf32>
    %52 = arith.mulf %51, %51 : vector<16x64xf32>
    %53 = arith.mulf %51, %52 : vector<16x64xf32>
    %cst_28 = arith.constant 4.471500e-02 : f32
    %54 = vector.broadcast %cst_28 : f32 to vector<16x64xf32>
    %55 = arith.mulf %54, %53 : vector<16x64xf32>
    %56 = arith.addf %51, %55 : vector<16x64xf32>
    %cst_29 = arith.constant 0.797884583 : f32
    %57 = vector.broadcast %cst_29 : f32 to vector<16x64xf32>
    %58 = arith.mulf %57, %56 : vector<16x64xf32>
    %59 = math.tanh %58 : vector<16x64xf32>
    %cst_30 = arith.constant 1.000000e+00 : f32
    %60 = vector.broadcast %cst_30 : f32 to vector<16x64xf32>
    %61 = arith.addf %60, %59 : vector<16x64xf32>
    %cst_31 = arith.constant 5.000000e-01 : f32
    %62 = vector.broadcast %cst_31 : f32 to vector<16x64xf32>
    %63 = arith.mulf %62, %61 : vector<16x64xf32>
    %64 = arith.mulf %51, %63 : vector<16x64xf32>
    %65 = vector.extract_strided_slice %64 {offsets = [0, 32], sizes = [16, 32], strides = [1, 1]} : vector<16x64xf32> to vector<16x32xf32>
    %cst_32 = arith.constant dense<0.000000e+00> : vector<16xf32>
    %66 = vector.multi_reduction <add>, %65, %cst_32 [1] : vector<16x32xf32> to vector<16xf32>
    %67 = vector.shape_cast %66 : vector<16xf32> to vector<16x1xf32>
    %cst_33 = arith.constant 3.200000e+01 : f32
    %68 = vector.broadcast %cst_33 : f32 to vector<16x1xf32>
    %69 = arith.divf %67, %68 : vector<16x1xf32>
    %70 = vector.broadcast %69 : vector<16x1xf32> to vector<16x32xf32>
    %71 = arith.subf %65, %70 : vector<16x32xf32>
    %72 = arith.mulf %71, %71 : vector<16x32xf32>
    %cst_34 = arith.constant dense<0.000000e+00> : vector<16xf32>
    %73 = vector.multi_reduction <add>, %72, %cst_34 [1] : vector<16x32xf32> to vector<16xf32>
    %74 = vector.shape_cast %73 : vector<16xf32> to vector<16x1xf32>
    %cst_35 = arith.constant 3.200000e+01 : f32
    %75 = vector.broadcast %cst_35 : f32 to vector<16x1xf32>
    %76 = arith.divf %74, %75 : vector<16x1xf32>
    %cst_36 = arith.constant 9.99999974E-6 : f32
    %77 = vector.broadcast %cst_36 : f32 to vector<16x1xf32>
    %78 = arith.addf %76, %77 : vector<16x1xf32>
    %79 = math.rsqrt %78 : vector<16x1xf32>
    %80 = vector.broadcast %79 : vector<16x1xf32> to vector<16x32xf32>
    %81 = arith.mulf %71, %80 : vector<16x32xf32>
    %c0_37 = arith.constant 0 : index
    %c0_38 = arith.constant 0 : index
    %82 = vector.load %arg6[%c0_37, %c0_38] : memref<1x32xf32, #tpu.memory_space<vmem>>, vector<1x32xf32>
    %83 = vector.broadcast %82 : vector<1x32xf32> to vector<16x32xf32>
    %84 = arith.mulf %81, %83 : vector<16x32xf32>
    %c0_39 = arith.constant 0 : index
    %c0_40 = arith.constant 0 : index
    %85 = vector.load %arg7[%c0_39, %c0_40] : memref<1x32xf32, #tpu.memory_space<vmem>>, vector<1x32xf32>
    %86 = vector.broadcast %85 : vector<1x32xf32> to vector<16x32xf32>
    %87 = arith.addf %84, %86 : vector<16x32xf32>
    %c0_i32 = arith.constant 0 : i32
    %88 = arith.cmpi sgt, %arg1, %c0_i32 : i32
    %89 = vector.extract_strided_slice %87 {offsets = [0, 0], sizes = [1, 32], strides = [1, 1]} : vector<16x32xf32> to vector<1x32xf32>
    %cst_41 = arith.constant 0.000000e+00 : f32
    %90 = vector.broadcast %cst_41 : f32 to vector<1x32xf32>
    %91 = arith.select %88, %89, %90 : vector<1x32xf32>
    %92 = tpu.iota {dimensions = array<i32: 0>} : vector<1x1xi32>
    %c8_i32_42 = arith.constant 8 : i32
    %93 = arith.addi %0, %c8_i32_42 : i32
    %94 = vector.broadcast %93 : i32 to vector<1x1xi32>
    %95 = arith.addi %94, %92 : vector<1x1xi32>
    %c8_i32_43 = arith.constant 8 : i32
    %96 = vector.broadcast %c8_i32_43 : i32 to vector<1x1xi32>
    %97 = arith.cmpi slt, %95, %96 : vector<1x1xi32>
    %98 = vector.extract_strided_slice %87 {offsets = [8, 0], sizes = [1, 32], strides = [1, 1]} : vector<16x32xf32> to vector<1x32xf32>
    %cst_44 = arith.constant 0.000000e+00 : f32
    %99 = vector.shape_cast %97 : vector<1x1xi1> to vector<1x1xi1>
    %100 = vector.broadcast %99 : vector<1x1xi1> to vector<1x32xi1>
    %101 = vector.broadcast %cst_44 : f32 to vector<1x32xf32>
    %102 = arith.select %100, %98, %101 : vector<1x32xi1>, vector<1x32xf32>
    %103 = tpu.concatenate %91, %44, %102 in 0 : vector<1x32xf32>, vector<8x32xf32>, vector<1x32xf32> -> vector<10x32xf32>
    %104 = vector.extract_strided_slice %103 {offsets = [0, 0], sizes = [8, 32], strides = [1, 1]} : vector<10x32xf32> to vector<8x32xf32>
    %c0_45 = arith.constant 0 : index
    %c0_46 = arith.constant 0 : index
    %105 = vector.load %arg8[%c0_45, %c0_46] : memref<3x32xf32, #tpu.memory_space<vmem>>, vector<1x32xf32>
    %106 = vector.broadcast %105 : vector<1x32xf32> to vector<8x32xf32>
    %107 = arith.mulf %104, %106 : vector<8x32xf32>
    %108 = vector.extract_strided_slice %103 {offsets = [1, 0], sizes = [8, 32], strides = [1, 1]} : vector<10x32xf32> to vector<8x32xf32>
    %c1 = arith.constant 1 : index
    %c0_47 = arith.constant 0 : index
    %109 = vector.load %arg8[%c1, %c0_47] : memref<3x32xf32, #tpu.memory_space<vmem>>, vector<1x32xf32>
    %110 = vector.broadcast %109 : vector<1x32xf32> to vector<8x32xf32>
    %111 = arith.mulf %108, %110 : vector<8x32xf32>
    %112 = arith.addf %107, %111 : vector<8x32xf32>
    %113 = vector.extract_strided_slice %103 {offsets = [2, 0], sizes = [8, 32], strides = [1, 1]} : vector<10x32xf32> to vector<8x32xf32>
    %c2 = arith.constant 2 : index
    %c0_48 = arith.constant 0 : index
    %114 = vector.load %arg8[%c2, %c0_48] : memref<3x32xf32, #tpu.memory_space<vmem>>, vector<1x32xf32>
    %115 = vector.broadcast %114 : vector<1x32xf32> to vector<8x32xf32>
    %116 = arith.mulf %113, %115 : vector<8x32xf32>
    %117 = arith.addf %112, %116 : vector<8x32xf32>
    %c0_49 = arith.constant 0 : index
    %c0_50 = arith.constant 0 : index
    %118 = vector.load %arg9[%c0_49, %c0_50] : memref<1x32xf32, #tpu.memory_space<vmem>>, vector<1x32xf32>
    %119 = vector.broadcast %118 : vector<1x32xf32> to vector<8x32xf32>
    %120 = arith.addf %117, %119 : vector<8x32xf32>
    %121 = arith.truncf %120 : vector<8x32xf32> to vector<8x32xbf16>
    %c0_51 = arith.constant 0 : index
    %c0_52 = arith.constant 0 : index
    %122 = vector.load %arg10[%c0_51, %c0_52] : memref<32x32xbf16, #tpu.memory_space<vmem>>, vector<32x32xbf16>
    %cst_53 = arith.constant dense<0.000000e+00> : vector<8x32xf32>
    %123 = tpu.matmul %121, %122, %cst_53 {dimension_numbers = #tpu.dot_dimension_numbers<[1], [0], [0], [1], [0, 0, 1, 1], [], []>} : vector<8x32xbf16>, vector<32x32xbf16>, vector<8x32xf32> -> vector<8x32xf32>
    %c0_54 = arith.constant 0 : index
    %c0_55 = arith.constant 0 : index
    %124 = vector.load %arg11[%c0_54, %c0_55] : memref<1x32xf32, #tpu.memory_space<vmem>>, vector<1x32xf32>
    %125 = vector.broadcast %124 : vector<1x32xf32> to vector<8x32xf32>
    %126 = arith.addf %123, %125 : vector<8x32xf32>
    %127 = arith.mulf %21, %126 : vector<8x32xf32>
    %128 = arith.truncf %127 : vector<8x32xf32> to vector<8x32xbf16>
    %c0_56 = arith.constant 0 : index
    %c0_57 = arith.constant 0 : index
    %129 = vector.load %arg12[%c0_56, %c0_57] : memref<32x32xbf16, #tpu.memory_space<vmem>>, vector<32x32xbf16>
    %cst_58 = arith.constant dense<0.000000e+00> : vector<8x32xf32>
    %130 = tpu.matmul %128, %129, %cst_58 {dimension_numbers = #tpu.dot_dimension_numbers<[1], [0], [0], [1], [0, 0, 1, 1], [], []>} : vector<8x32xbf16>, vector<32x32xbf16>, vector<8x32xf32> -> vector<8x32xf32>
    %c0_59 = arith.constant 0 : index
    %c0_60 = arith.constant 0 : index
    %131 = vector.load %arg13[%c0_59, %c0_60] : memref<1x32xf32, #tpu.memory_space<vmem>>, vector<1x32xf32>
    %132 = vector.broadcast %131 : vector<1x32xf32> to vector<8x32xf32>
    %133 = arith.addf %130, %132 : vector<8x32xf32>
    %c0_61 = arith.constant 0 : index
    %c0_62 = arith.constant 0 : index
    %c0_63 = arith.constant 0 : index
    %134 = vector.load %arg14[%c0_61, %c0_62, %c0_63] : memref<1x8x32xf32, #tpu.memory_space<vmem>>, vector<1x8x32xf32>
    %135 = vector.shape_cast %134 : vector<1x8x32xf32> to vector<8x32xf32>
    %136 = vector.shape_cast %133 : vector<8x32xf32> to vector<1x8x32xf32>
    tpu.vector_store %arg14[%c0_61, %c0_62, %c0_63], %136 {strides = array<i32>} : memref<1x8x32xf32, #tpu.memory_space<vmem>>, vector<1x8x32xf32>,
    return
  }
  func.func @transform_0(%arg0: i32, %arg1: i32) -> (i32, i32, i32) {
    %c0_i32 = arith.constant 0 : i32
    %c0_i32_0 = arith.constant 0 : i32
    return %arg0, %arg1, %c0_i32 : i32, i32, i32
  }
  func.func @transform_1(%arg0: i32, %arg1: i32) -> (i32, i32, i32, i32) {
    %c0_i32 = arith.constant 0 : i32
    %c0_i32_0 = arith.constant 0 : i32
    %c0_i32_1 = arith.constant 0 : i32
    return %arg0, %arg1, %c0_i32, %c0_i32_0 : i32, i32, i32, i32
  }
  func.func @transform_2(%arg0: i32, %arg1: i32) -> (i32, i32) {
    %c0_i32 = arith.constant 0 : i32
    %c0_i32_0 = arith.constant 0 : i32
    %c0_i32_1 = arith.constant 0 : i32
    return %c0_i32, %c0_i32_0 : i32, i32
  }
  func.func @transform_3(%arg0: i32, %arg1: i32) -> (i32, i32) {
    %c0_i32 = arith.constant 0 : i32
    %c0_i32_0 = arith.constant 0 : i32
    %c0_i32_1 = arith.constant 0 : i32
    return %c0_i32, %c0_i32_0 : i32, i32
  }
  func.func @transform_4(%arg0: i32, %arg1: i32) -> (i32, i32) {
    %c0_i32 = arith.constant 0 : i32
    %c0_i32_0 = arith.constant 0 : i32
    %c0_i32_1 = arith.constant 0 : i32
    return %c0_i32, %c0_i32_0 : i32, i32
  }
  func.func @transform_5(%arg0: i32, %arg1: i32) -> (i32, i32) {
    %c0_i32 = arith.constant 0 : i32
    %c0_i32_0 = arith.constant 0 : i32
    %c0_i32_1 = arith.constant 0 : i32
    return %c0_i32, %c0_i32_0 : i32, i32
  }
  func.func @transform_6(%arg0: i32, %arg1: i32) -> (i32, i32) {
    %c0_i32 = arith.constant 0 : i32
    %c0_i32_0 = arith.constant 0 : i32
    %c0_i32_1 = arith.constant 0 : i32
    return %c0_i32, %c0_i32_0 : i32, i32
  }
  func.func @transform_7(%arg0: i32, %arg1: i32) -> (i32, i32) {
    %c0_i32 = arith.constant 0 : i32
    %c0_i32_0 = arith.constant 0 : i32
    %c0_i32_1 = arith.constant 0 : i32
    return %c0_i32, %c0_i32_0 : i32, i32
  }
  func.func @transform_8(%arg0: i32, %arg1: i32) -> (i32, i32) {
    %c0_i32 = arith.constant 0 : i32
    %c0_i32_0 = arith.constant 0 : i32
    %c0_i32_1 = arith.constant 0 : i32
    return %c0_i32, %c0_i32_0 : i32, i32
  }
  func.func @transform_9(%arg0: i32, %arg1: i32) -> (i32, i32) {
    %c0_i32 = arith.constant 0 : i32
    %c0_i32_0 = arith.constant 0 : i32
    %c0_i32_1 = arith.constant 0 : i32
    return %c0_i32, %c0_i32_0 : i32, i32
  }
  func.func @transform_10(%arg0: i32, %arg1: i32) -> (i32, i32) {
    %c0_i32 = arith.constant 0 : i32
    %c0_i32_0 = arith.constant 0 : i32
    %c0_i32_1 = arith.constant 0 : i32
    return %c0_i32, %c0_i32_0 : i32, i32
  }
  func.func @transform_11(%arg0: i32, %arg1: i32) -> (i32, i32) {
    %c0_i32 = arith.constant 0 : i32
    %c0_i32_0 = arith.constant 0 : i32
    %c0_i32_1 = arith.constant 0 : i32
    return %c0_i32, %c0_i32_0 : i32, i32
  }
  func.func @transform_12(%arg0: i32, %arg1: i32) -> (i32, i32, i32) {
    %c0_i32 = arith.constant 0 : i32
    %c0_i32_0 = arith.constant 0 : i32
    return %arg0, %arg1, %c0_i32 : i32, i32, i32
  }
}

module attributes {stable_mosaic.version = 11 : i64} {
  func.func @cgmlp_kernel(%arg0: i32, %arg1: i32, %arg2: memref<1x8x32xbf16, #tpu.memory_space<vmem>>, %arg3: memref<1x1x16x32xbf16, #tpu.memory_space<vmem>>, %arg4: memref<32x64xbf16, #tpu.memory_space<vmem>>, %arg5: memref<1x64xf32, #tpu.memory_space<vmem>>, %arg6: memref<1x32xf32, #tpu.memory_space<vmem>>, %arg7: memref<1x32xf32, #tpu.memory_space<vmem>>, %arg8: memref<3x32xf32, #tpu.memory_space<vmem>>, %arg9: memref<1x32xf32, #tpu.memory_space<vmem>>, %arg10: memref<32x32xbf16, #tpu.memory_space<vmem>>, %arg11: memref<1x32xf32, #tpu.memory_space<vmem>>, %arg12: memref<32x32xbf16, #tpu.memory_space<vmem>>, %arg13: memref<1x32xf32, #tpu.memory_space<vmem>>, %arg14: memref<1x8x32xf32, #tpu.memory_space<vmem>>) attributes {dimension_semantics = [#tpu.dimension_semantics<parallel>, #tpu.dimension_semantics<parallel>], iteration_bounds = array<i64: 2, 1>, scalar_prefetch = 0 : i64, scratch_operands = 0 : i64, tpu.core_type = #tpu.core_type<tc>, window_params = [{transform_indices = @transform_0, window_bounds = array<i64: 1, 8, 32>}, {transform_indices = @transform_1, window_bounds = array<i64: 1, 1, 16, 32>}, {pipeline_mode = #tpu.pipeline_mode<synchronous>, transform_indices = @transform_2, window_bounds = array<i64: 32, 64>}, {pipeline_mode = #tpu.pipeline_mode<synchronous>, transform_indices = @transform_3, window_bounds = array<i64: 1, 64>}, {pipeline_mode = #tpu.pipeline_mode<synchronous>, transform_indices = @transform_4, window_bounds = array<i64: 1, 32>}, {pipeline_mode = #tpu.pipeline_mode<synchronous>, transform_indices = @transform_5, window_bounds = array<i64: 1, 32>}, {pipeline_mode = #tpu.pipeline_mode<synchronous>, transform_indices = @transform_6, window_bounds = array<i64: 3, 32>}, {pipeline_mode = #tpu.pipeline_mode<synchronous>, transform_indices = @transform_7, window_bounds = array<i64: 1, 32>}, {pipeline_mode = #tpu.pipeline_mode<synchronous>, transform_indices = @transform_8, window_bounds = array<i64: 32, 32>}, {pipeline_mode = #tpu.pipeline_mode<synchronous>, transform_indices = @transform_9, window_bounds = array<i64: 1, 32>}, {pipeline_mode = #tpu.pipeline_mode<synchronous>, transform_indices = @transform_10, window_bounds = array<i64: 32, 32>}, {pipeline_mode = #tpu.pipeline_mode<synchronous>, transform_indices = @transform_11, window_bounds = array<i64: 1, 32>}, {transform_indices = @transform_12, window_bounds = array<i64: 1, 8, 32>}]} {
    %c8_i32 = arith.constant 8 : i32
    %0 = arith.muli %arg1, %c8_i32 : i32
    %c0 = arith.constant 0 : index
    %c0_0 = arith.constant 0 : index
    %c0_1 = arith.constant 0 : index
    %1 = vector.load %arg2[%c0, %c0_0, %c0_1] : memref<1x8x32xbf16, #tpu.memory_space<vmem>>, vector<1x8x32xbf16>
    %2 = vector.shape_cast %1 : vector<1x8x32xbf16> to vector<8x32xbf16>
    %c0_2 = arith.constant 0 : index
    %c0_3 = arith.constant 0 : index
    %3 = vector.load %arg4[%c0_2, %c0_3] : memref<32x64xbf16, #tpu.memory_space<vmem>>, vector<32x64xbf16>
    %cst = arith.constant dense<0.000000e+00> : vector<8x64xf32>
    %4 = tpu.matmul %2, %3, %cst {dimension_numbers = #tpu.dot_dimension_numbers<[1], [0], [0], [1], [0, 0, 1, 1], [], []>} : vector<8x32xbf16>, vector<32x64xbf16>, vector<8x64xf32> -> vector<8x64xf32>
    %c0_4 = arith.constant 0 : index
    %c0_5 = arith.constant 0 : index
    %5 = vector.load %arg5[%c0_4, %c0_5] : memref<1x64xf32, #tpu.memory_space<vmem>>, vector<1x64xf32>
    %6 = vector.broadcast %5 : vector<1x64xf32> to vector<8x64xf32>
    %7 = arith.addf %4, %6 : vector<8x64xf32>
    %8 = arith.mulf %7, %7 : vector<8x64xf32>
    %9 = arith.mulf %7, %8 : vector<8x64xf32>
    %cst_6 = arith.constant 4.471500e-02 : f32
    %10 = vector.broadcast %cst_6 : f32 to vector<8x64xf32>
    %11 = arith.mulf %10, %9 : vector<8x64xf32>
    %12 = arith.addf %7, %11 : vector<8x64xf32>
    %cst_7 = arith.constant 0.797884583 : f32
    %13 = vector.broadcast %cst_7 : f32 to vector<8x64xf32>
    %14 = arith.mulf %13, %12 : vector<8x64xf32>
    %15 = math.tanh %14 : vector<8x64xf32>
    %cst_8 = arith.constant 1.000000e+00 : f32
    %16 = vector.broadcast %cst_8 : f32 to vector<8x64xf32>
    %17 = arith.addf %16, %15 : vector<8x64xf32>
    %cst_9 = arith.constant 5.000000e-01 : f32
    %18 = vector.broadcast %cst_9 : f32 to vector<8x64xf32>
    %19 = arith.mulf %18, %17 : vector<8x64xf32>
    %20 = arith.mulf %7, %19 : vector<8x64xf32>
    %21 = vector.extract_strided_slice %20 {offsets = [0, 0], sizes = [8, 32], strides = [1, 1]} : vector<8x64xf32> to vector<8x32xf32>
    %22 = vector.extract_strided_slice %20 {offsets = [0, 32], sizes = [8, 32], strides = [1, 1]} : vector<8x64xf32> to vector<8x32xf32>
    %cst_10 = arith.constant dense<0.000000e+00> : vector<8xf32>
    %23 = vector.multi_reduction <add>, %22, %cst_10 [1] : vector<8x32xf32> to vector<8xf32>
    %24 = vector.shape_cast %23 : vector<8xf32> to vector<8x1xf32>
    %cst_11 = arith.constant 3.200000e+01 : f32
    %25 = vector.broadcast %cst_11 : f32 to vector<8x1xf32>
    %26 = arith.divf %24, %25 : vector<8x1xf32>
    %27 = vector.broadcast %26 : vector<8x1xf32> to vector<8x32xf32>
    %28 = arith.subf %22, %27 : vector<8x32xf32>
    %29 = arith.mulf %28, %28 : vector<8x32xf32>
    %cst_12 = arith.constant dense<0.000000e+00> : vector<8xf32>
    %30 = vector.multi_reduction <add>, %29, %cst_12 [1] : vector<8x32xf32> to vector<8xf32>
    %31 = vector.shape_cast %30 : vector<8xf32> to vector<8x1xf32>
    %cst_13 = arith.constant 3.200000e+01 : f32
    %32 = vector.broadcast %cst_13 : f32 to vector<8x1xf32>
    %33 = arith.divf %31, %32 : vector<8x1xf32>
    %cst_14 = arith.constant 9.99999974E-6 : f32
    %34 = vector.broadcast %cst_14 : f32 to vector<8x1xf32>
    %35 = arith.addf %33, %34 : vector<8x1xf32>
    %36 = math.rsqrt %35 : vector<8x1xf32>
    %37 = vector.broadcast %36 : vector<8x1xf32> to vector<8x32xf32>
    %38 = arith.mulf %28, %37 : vector<8x32xf32>
    %c0_15 = arith.constant 0 : index
    %c0_16 = arith.constant 0 : index
    %39 = vector.load %arg6[%c0_15, %c0_16] : memref<1x32xf32, #tpu.memory_space<vmem>>, vector<1x32xf32>
    %40 = vector.broadcast %39 : vector<1x32xf32> to vector<8x32xf32>
    %41 = arith.mulf %38, %40 : vector<8x32xf32>
    %c0_17 = arith.constant 0 : index
    %c0_18 = arith.constant 0 : index
    %42 = vector.load %arg7[%c0_17, %c0_18] : memref<1x32xf32, #tpu.memory_space<vmem>>, vector<1x32xf32>
    %43 = vector.broadcast %42 : vector<1x32xf32> to vector<8x32xf32>
    %44 = arith.addf %41, %43 : vector<8x32xf32>
    %c0_19 = arith.constant 0 : index
    %c0_20 = arith.constant 0 : index
    %c0_21 = arith.constant 0 : index
    %c0_22 = arith.constant 0 : index
    %45 = vector.load %arg3[%c0_19, %c0_20, %c0_21, %c0_22] : memref<1x1x16x32xbf16, #tpu.memory_space<vmem>>, vector<1x1x16x32xbf16>
    %46 = vector.shape_cast %45 : vector<1x1x16x32xbf16> to vector<16x32xbf16>
    %c0_23 = arith.constant 0 : index
    %c0_24 = arith.constant 0 : index
    %47 = vector.load %arg4[%c0_23, %c0_24] : memref<32x64xbf16, #tpu.memory_space<vmem>>, vector<32x64xbf16>
    %cst_25 = arith.constant dense<0.000000e+00> : vector<16x64xf32>
    %48 = tpu.matmul %46, %47, %cst_25 {dimension_numbers = #tpu.dot_dimension_numbers<[1], [0], [0], [1], [0, 0, 1, 1], [], []>} : vector<16x32xbf16>, vector<32x64xbf16>, vector<16x64xf32> -> vector<16x64xf32>
    %c0_26 = arith.constant 0 : index
    %c0_27 = arith.constant 0 : index
    %49 = vector.load %arg5[%c0_26, %c0_27] : memref<1x64xf32, #tpu.memory_space<vmem>>, vector<1x64xf32>
    %50 = vector.broadcast %49 : vector<1x64xf32> to vector<16x64xf32>
    %51 = arith.addf %48, %50 : vector<16x64xf32>
    %52 = arith.mulf %51, %51 : vector<16x64xf32>
    %53 = arith.mulf %51, %52 : vector<16x64xf32>
    %cst_28 = arith.constant 4.471500e-02 : f32
    %54 = vector.broadcast %cst_28 : f32 to vector<16x64xf32>
    %55 = arith.mulf %54, %53 : vector<16x64xf32>
    %56 = arith.addf %51, %55 : vector<16x64xf32>
    %cst_29 = arith.constant 0.797884583 : f32
    %57 = vector.broadcast %cst_29 : f32 to vector<16x64xf32>
    %58 = arith.mulf %57, %56 : vector<16x64xf32>
    %59 = math.tanh %58 : vector<16x64xf32>
    %cst_30 = arith.constant 1.000000e+00 : f32
    %60 = vector.broadcast %cst_30 : f32 to vector<16x64xf32>
    %61 = arith.addf %60, %59 : vector<16x64xf32>
    %cst_31 = arith.constant 5.000000e-01 : f32
    %62 = vector.broadcast %cst_31 : f32 to vector<16x64xf32>
    %63 = arith.mulf %62, %61 : vector<16x64xf32>
    %64 = arith.mulf %51, %63 : vector<16x64xf32>
    %65 = vector.extract_strided_slice %64 {offsets = [0, 32], sizes = [16, 32], strides = [1, 1]} : vector<16x64xf32> to vector<16x32xf32>
    %cst_32 = arith.constant dense<0.000000e+00> : vector<16xf32>
    %66 = vector.multi_reduction <add>, %65, %cst_32 [1] : vector<16x32xf32> to vector<16xf32>
    %67 = vector.shape_cast %66 : vector<16xf32> to vector<16x1xf32>
    %cst_33 = arith.constant 3.200000e+01 : f32
    %68 = vector.broadcast %cst_33 : f32 to vector<16x1xf32>
    %69 = arith.divf %67, %68 : vector<16x1xf32>
    %70 = vector.broadcast %69 : vector<16x1xf32> to vector<16x32xf32>
    %71 = arith.subf %65, %70 : vector<16x32xf32>
    %72 = arith.mulf %71, %71 : vector<16x32xf32>
    %cst_34 = arith.constant dense<0.000000e+00> : vector<16xf32>
    %73 = vector.multi_reduction <add>, %72, %cst_34 [1] : vector<16x32xf32> to vector<16xf32>
    %74 = vector.shape_cast %73 : vector<16xf32> to vector<16x1xf32>
    %cst_35 = arith.constant 3.200000e+01 : f32
    %75 = vector.broadcast %cst_35 : f32 to vector<16x1xf32>
    %76 = arith.divf %74, %75 : vector<16x1xf32>
    %cst_36 = arith.constant 9.99999974E-6 : f32
    %77 = vector.broadcast %cst_36 : f32 to vector<16x1xf32>
    %78 = arith.addf %76, %77 : vector<16x1xf32>
    %79 = math.rsqrt %78 : vector<16x1xf32>
    %80 = vector.broadcast %79 : vector<16x1xf32> to vector<16x32xf32>
    %81 = arith.mulf %71, %80 : vector<16x32xf32>
    %c0_37 = arith.constant 0 : index
    %c0_38 = arith.constant 0 : index
    %82 = vector.load %arg6[%c0_37, %c0_38] : memref<1x32xf32, #tpu.memory_space<vmem>>, vector<1x32xf32>
    %83 = vector.broadcast %82 : vector<1x32xf32> to vector<16x32xf32>
    %84 = arith.mulf %81, %83 : vector<16x32xf32>
    %c0_39 = arith.constant 0 : index
    %c0_40 = arith.constant 0 : index
    %85 = vector.load %arg7[%c0_39, %c0_40] : memref<1x32xf32, #tpu.memory_space<vmem>>, vector<1x32xf32>
    %86 = vector.broadcast %85 : vector<1x32xf32> to vector<16x32xf32>
    %87 = arith.addf %84, %86 : vector<16x32xf32>
    %c0_i32 = arith.constant 0 : i32
    %88 = arith.cmpi sgt, %arg1, %c0_i32 : i32
    %89 = vector.extract_strided_slice %87 {offsets = [0, 0], sizes = [1, 32], strides = [1, 1]} : vector<16x32xf32> to vector<1x32xf32>
    %cst_41 = arith.constant 0.000000e+00 : f32
    %90 = vector.broadcast %cst_41 : f32 to vector<1x32xf32>
    %91 = arith.select %88, %89, %90 : vector<1x32xf32>
    %92 = tpu.iota {dimensions = array<i32: 0>} : vector<1x1xi32>
    %c8_i32_42 = arith.constant 8 : i32
    %93 = arith.addi %0, %c8_i32_42 : i32
    %94 = vector.broadcast %93 : i32 to vector<1x1xi32>
    %95 = arith.addi %94, %92 : vector<1x1xi32>
    %c8_i32_43 = arith.constant 8 : i32
    %96 = vector.broadcast %c8_i32_43 : i32 to vector<1x1xi32>
    %97 = arith.cmpi slt, %95, %96 : vector<1x1xi32>
    %98 = vector.extract_strided_slice %87 {offsets = [8, 0], sizes = [1, 32], strides = [1, 1]} : vector<16x32xf32> to vector<1x32xf32>
    %cst_44 = arith.constant 0.000000e+00 : f32
    %99 = vector.shape_cast %97 : vector<1x1xi1> to vector<1x1xi1>
    %100 = vector.broadcast %99 : vector<1x1xi1> to vector<1x32xi1>
    %101 = vector.broadcast %cst_44 : f32 to vector<1x32xf32>
    %102 = arith.select %100, %98, %101 : vector<1x32xi1>, vector<1x32xf32>
    %103 = tpu.concatenate %91, %44, %102 in 0 : vector<1x32xf32>, vector<8x32xf32>, vector<1x32xf32> -> vector<10x32xf32>
    %104 = vector.extract_strided_slice %103 {offsets = [0, 0], sizes = [8, 32], strides = [1, 1]} : vector<10x32xf32> to vector<8x32xf32>
    %c0_45 = arith.constant 0 : index
    %c0_46 = arith.constant 0 : index
    %105 = vector.load %arg8[%c0_45, %c0_46] : memref<3x32xf32, #tpu.memory_space<vmem>>, vector<1x32xf32>
    %106 = vector.broadcast %105 : vector<1x32xf32> to vector<8x32xf32>
    %107 = arith.mulf %104, %106 : vector<8x32xf32>
    %108 = vector.extract_strided_slice %103 {offsets = [1, 0], sizes = [8, 32], strides = [1, 1]} : vector<10x32xf32> to vector<8x32xf32>
    %c1 = arith.constant 1 : index
    %c0_47 = arith.constant 0 : index
    %109 = vector.load %arg8[%c1, %c0_47] : memref<3x32xf32, #tpu.memory_space<vmem>>, vector<1x32xf32>
    %110 = vector.broadcast %109 : vector<1x32xf32> to vector<8x32xf32>
    %111 = arith.mulf %108, %110 : vector<8x32xf32>
    %112 = arith.addf %107, %111 : vector<8x32xf32>
    %113 = vector.extract_strided_slice %103 {offsets = [2, 0], sizes = [8, 32], strides = [1, 1]} : vector<10x32xf32> to vector<8x32xf32>
    %c2 = arith.constant 2 : index
    %c0_48 = arith.constant 0 : index
    %114 = vector.load %arg8[%c2, %c0_48] : memref<3x32xf32, #tpu.memory_space<vmem>>, vector<1x32xf32>
    %115 = vector.broadcast %114 : vector<1x32xf32> to vector<8x32xf32>
    %116 = arith.mulf %113, %115 : vector<8x32xf32>
    %117 = arith.addf %112, %116 : vector<8x32xf32>
    %c0_49 = arith.constant 0 : index
    %c0_50 = arith.constant 0 : index
    %118 = vector.load %arg9[%c0_49, %c0_50] : memref<1x32xf32, #tpu.memory_space<vmem>>, vector<1x32xf32>
    %119 = vector.broadcast %118 : vector<1x32xf32> to vector<8x32xf32>
    %120 = arith.addf %117, %119 : vector<8x32xf32>
    %121 = arith.truncf %120 : vector<8x32xf32> to vector<8x32xbf16>
    %c0_51 = arith.constant 0 : index
    %c0_52 = arith.constant 0 : index
    %122 = vector.load %arg10[%c0_51, %c0_52] : memref<32x32xbf16, #tpu.memory_space<vmem>>, vector<32x32xbf16>
    %cst_53 = arith.constant dense<0.000000e+00> : vector<8x32xf32>
    %123 = tpu.matmul %121, %122, %cst_53 {dimension_numbers = #tpu.dot_dimension_numbers<[1], [0], [0], [1], [0, 0, 1, 1], [], []>} : vector<8x32xbf16>, vector<32x32xbf16>, vector<8x32xf32> -> vector<8x32xf32>
    %c0_54 = arith.constant 0 : index
    %c0_55 = arith.constant 0 : index
    %124 = vector.load %arg11[%c0_54, %c0_55] : memref<1x32xf32, #tpu.memory_space<vmem>>, vector<1x32xf32>
    %125 = vector.broadcast %124 : vector<1x32xf32> to vector<8x32xf32>
    %126 = arith.addf %123, %125 : vector<8x32xf32>
    %127 = arith.mulf %21, %126 : vector<8x32xf32>
    %128 = arith.truncf %127 : vector<8x32xf32> to vector<8x32xbf16>
    %c0_56 = arith.constant 0 : index
    %c0_57 = arith.constant 0 : index
    %129 = vector.load %arg12[%c0_56, %c0_57] : memref<32x32xbf16, #tpu.memory_space<vmem>>, vector<32x32xbf16>
    %cst_58 = arith.constant dense<0.000000e+00> : vector<8x32xf32>
    %130 = tpu.matmul %128, %129, %cst_58 {dimension_numbers = #tpu.dot_dimension_numbers<[1], [0], [0], [1], [0, 0, 1, 1], [], []>} : vector<8x32xbf16>, vector<32x32xbf16>, vector<8x32xf32> -> vector<8x32xf32>
    %c0_59 = arith.constant 0 : index
    %c0_60 = arith.constant 0 : index
    %131 = vector.load %arg13[%c0_59, %c0_60] : memref<1x32xf32, #tpu.memory_space<vmem>>, vector<1x32xf32>
    %132 = vector.broadcast %131 : vector<1x32xf32> to vector<8x32xf32>
    %133 = arith.addf %130, %132 : vector<8x32xf32>
    %c0_61 = arith.constant 0 : index
    %c0_62 = arith.constant 0 : index
    %c0_63 = arith.constant 0 : index
    %134 = vector.load %arg14[%c0_61, %c0_62, %c0_63] : memref<1x8x32xf32, #tpu.memory_space<vmem>>, vector<1x8x32xf32>
    %135 = vector.shape_cast %134 : vector<1x8x32xf32> to vector<8x32xf32>
    %136 = vector.shape_cast %133 : vector<8x32xf32> to vector<1x8x32xf32>
    tpu.vector_store %arg14[%c0_61, %c0_62, %c0_63], %136 {strides = array<i32>} : memref<1x8x32xf32, #tpu.memory_space<vmem>>, vector<1x8x32xf32>,
    return
  }
  func.func @transform_0(%arg0: i32, %arg1: i32) -> (i32, i32, i32) {
    %c0_i32 = arith.constant 0 : i32
    %c0_i32_0 = arith.constant 0 : i32
    return %arg0, %arg1, %c0_i32 : i32, i32, i32
  }
  func.func @transform_1(%arg0: i32, %arg1: i32) -> (i32, i32, i32, i32) {
    %c0_i32 = arith.constant 0 : i32
    %c0_i32_0 = arith.constant 0 : i32
    %c0_i32_1 = arith.constant 0 : i32
    return %arg0, %arg1, %c0_i32, %c0_i32_0 : i32, i32, i32, i32
  }
  func.func @transform_2(%arg0: i32, %arg1: i32) -> (i32, i32) {
    %c0_i32 = arith.constant 0 : i32
    %c0_i32_0 = arith.constant 0 : i32
    %c0_i32_1 = arith.constant 0 : i32
    return %c0_i32, %c0_i32_0 : i32, i32
  }
  func.func @transform_3(%arg0: i32, %arg1: i32) -> (i32, i32) {
    %c0_i32 = arith.constant 0 : i32
    %c0_i32_0 = arith.constant 0 : i32
    %c0_i32_1 = arith.constant 0 : i32
    return %c0_i32, %c0_i32_0 : i32, i32
  }
  func.func @transform_4(%arg0: i32, %arg1: i32) -> (i32, i32) {
    %c0_i32 = arith.constant 0 : i32
    %c0_i32_0 = arith.constant 0 : i32
    %c0_i32_1 = arith.constant 0 : i32
    return %c0_i32, %c0_i32_0 : i32, i32
  }
  func.func @transform_5(%arg0: i32, %arg1: i32) -> (i32, i32) {
    %c0_i32 = arith.constant 0 : i32
    %c0_i32_0 = arith.constant 0 : i32
    %c0_i32_1 = arith.constant 0 : i32
    return %c0_i32, %c0_i32_0 : i32, i32
  }
  func.func @transform_6(%arg0: i32, %arg1: i32) -> (i32, i32) {
    %c0_i32 = arith.constant 0 : i32
    %c0_i32_0 = arith.constant 0 : i32
    %c0_i32_1 = arith.constant 0 : i32
    return %c0_i32, %c0_i32_0 : i32, i32
  }
  func.func @transform_7(%arg0: i32, %arg1: i32) -> (i32, i32) {
    %c0_i32 = arith.constant 0 : i32
    %c0_i32_0 = arith.constant 0 : i32
    %c0_i32_1 = arith.constant 0 : i32
    return %c0_i32, %c0_i32_0 : i32, i32
  }
  func.func @transform_8(%arg0: i32, %arg1: i32) -> (i32, i32) {
    %c0_i32 = arith.constant 0 : i32
    %c0_i32_0 = arith.constant 0 : i32
    %c0_i32_1 = arith.constant 0 : i32
    return %c0_i32, %c0_i32_0 : i32, i32
  }
  func.func @transform_9(%arg0: i32, %arg1: i32) -> (i32, i32) {
    %c0_i32 = arith.constant 0 : i32
    %c0_i32_0 = arith.constant 0 : i32
    %c0_i32_1 = arith.constant 0 : i32
    return %c0_i32, %c0_i32_0 : i32, i32
  }
  func.func @transform_10(%arg0: i32, %arg1: i32) -> (i32, i32) {
    %c0_i32 = arith.constant 0 : i32
    %c0_i32_0 = arith.constant 0 : i32
    %c0_i32_1 = arith.constant 0 : i32
    return %c0_i32, %c0_i32_0 : i32, i32
  }
  func.func @transform_11(%arg0: i32, %arg1: i32) -> (i32, i32) {
    %c0_i32 = arith.constant 0 : i32
    %c0_i32_0 = arith.constant 0 : i32
    %c0_i32_1 = arith.constant 0 : i32
    return %c0_i32, %c0_i32_0 : i32, i32
  }
  func.func @transform_12(%arg0: i32, %arg1: i32) -> (i32, i32, i32) {
    %c0_i32 = arith.constant 0 : i32
    %c0_i32_0 = arith.constant 0 : i32
    return %arg0, %arg1, %c0_i32 : i32, i32, i32
  }
}

</mosaic_0001>

<llo_original>
// kernel: tpu_custom_call.1
$region0: #{tpu_custom_call.1}
  #allocation0 [shape = 'u32[]', space=smem, size = 0x4, offset = 0x4, fixed_abs, tag = 'smem constant byte address 0x4 - core index']
  #allocation1 [shape = 'u32[144,128]{1,0:T(1,128)}', space=vmem, size = 0x12000, scoped, tag = 'internal scratch']
  %s0 = inlined_call_operand.hbm [shape: bf16[2,8,32], index: 0, kind: input, shape index: {}]
  %s1 = inlined_call_operand.hbm [shape: bf16[2,1,16,32], index: 1, kind: input, shape index: {}]
  %s2 = inlined_call_operand.hbm [shape: bf16[32,64], index: 2, kind: input, shape index: {}]
  %s3 = inlined_call_operand.vmem [shape: f32[1,64], index: 3, kind: input, shape index: {}]
  %s4 = inlined_call_operand.vmem [shape: f32[1,32], index: 4, kind: input, shape index: {}]
  %s5 = inlined_call_operand.hbm [shape: f32[1,32], index: 5, kind: input, shape index: {}]
  %s6 = inlined_call_operand.hbm [shape: f32[3,32], index: 6, kind: input, shape index: {}]
  %s7 = inlined_call_operand.hbm [shape: f32[1,32], index: 7, kind: input, shape index: {}]
  %s8 = inlined_call_operand.hbm [shape: bf16[32,32], index: 8, kind: input, shape index: {}]
  %s9 = inlined_call_operand.hbm [shape: f32[1,32], index: 9, kind: input, shape index: {}]
  %s10 = inlined_call_operand.vmem [shape: bf16[32,32], index: 10, kind: input, shape index: {}]
  %s11 = inlined_call_operand.vmem [shape: f32[1,32], index: 11, kind: input, shape index: {}]
  %s12 = inlined_call_operand.hbm [shape: f32[2,8,32], index: 12, kind: output, shape index: {}]
  %s13 = sld [smem:[#allocation0]]
  $region113: #{tpu_custom_call.1} parent=0
    _
  %s15 = ssub.s32 1, %s13
  %s16 = scalar_select 0, %s15, %s13
  $region1: #{tpu_custom_call.1} parent=0
    #allocation2 [shape = 'u8[4096]{0}', space=vmem, size = 0x1000, scoped, tag = 'input window, operand 0']
    #allocation3 [shape = 's32[2]{0}', space=sflag, size = 0x8, scoped, tag = 'scoped memory for tpu_custom_call.1']
    #allocation4 [shape = 's32[2]{0}', space=sflag, size = 0x8, scoped, tag = 'scoped memory for tpu_custom_call.1']
    #allocation5 [shape = 'u8[8192]{0}', space=vmem, size = 0x2000, scoped, tag = 'input window, operand 1']
    #allocation6 [shape = 's32[2]{0}', space=sflag, size = 0x8, scoped, tag = 'scoped memory for tpu_custom_call.1']
    #allocation7 [shape = 'u8[8192]{0}', space=vmem, size = 0x2000, scoped, tag = 'input window, operand 2, single buffered']
    #allocation8 [shape = 'u8[512]{0}', space=vmem, size = 0x400, scoped, tag = 'input window, operand 5, single buffered']
    #allocation9 [shape = 's32[1]{0}', space=sflag, size = 0x4, scoped, tag = 'scoped memory for tpu_custom_call.1']
    #allocation10 [shape = 'u8[2048]{0}', space=vmem, size = 0x800, scoped, tag = 'input window, operand 6, single buffered']
    #allocation11 [shape = 'u8[512]{0}', space=vmem, size = 0x400, scoped, tag = 'input window, operand 7, single buffered']
    #allocation12 [shape = 's32[1]{0}', space=sflag, size = 0x4, scoped, tag = 'scoped memory for tpu_custom_call.1']
    #allocation13 [shape = 'u8[8192]{0}', space=vmem, size = 0x2000, scoped, tag = 'input window, operand 8, single buffered']
    #allocation14 [shape = 'u8[512]{0}', space=vmem, size = 0x400, scoped, tag = 'input window, operand 9, single buffered']
    #allocation15 [shape = 's32[1]{0}', space=sflag, size = 0x4, scoped, tag = 'scoped memory for tpu_custom_call.1']
    #allocation16 [shape = 'u8[8192]{0}', space=vmem, size = 0x2000, scoped, tag = 'output window, operand 0']
    %17 = vsyncpa [#allocation3], 0
    %s18 = scalar_lea.sflag [#allocation3], 1
    %19 = vsyncpa %s18, 0
    %20 = vsyncpa [#allocation6], 0
    %s21 = scalar_lea.sflag [#allocation6], 1
    %22 = vsyncpa %s21, 0
    %23 = vsyncpa [#allocation9], 0
    %24 = vsyncpa [#allocation12], 0
    %25 = vsyncpa [#allocation15], 0
    %26 = vsyncpa [#allocation4], 0
    %s27 = scalar_lea.sflag [#allocation4], 1
    %28 = vsyncpa %s27, 0
    loop: start=0, step=1, limit=4
    $region2: #{tpu_custom_call.1} parent=1 // loop_pre_header
      _
    $region3: #{tpu_custom_call.1} parent=1 // loop_header
      %s30 = sphi 0, %s34
      %p31 = scmp.ge.s32.totalorder %s30, 4
      %s37 = sphi 0, %s49
      %s38 = sphi 0, %s45
      %s39 = sphi 0, %s37
      %s40 = sphi 0, %s38
      %s41 = sphi 0, %s39
      %s42 = sphi 0, %s40
      %s54 = sphi 0, %s56
      %s57 = sphi 0, %s54
      %s58 = sphi 0, %s57
      %s74 = sphi 0, %s58
      %s82 = sphi 0, %s84
      %s85 = sphi 0, %s82
      %s86 = sphi 0, %s85
      %s102 = sphi 0, %s86
      %s106 = sphi 0, %s106
      %s108 = sphi 0, %s106
      %s109 = sphi 0, %s108
      %s123 = sphi 0, %s109
      %s127 = sphi 0, %s127
      %s129 = sphi 0, %s127
      %s130 = sphi 0, %s129
      %s144 = sphi 0, %s130
      %s148 = sphi 0, %s148
      %s150 = sphi 0, %s148
      %s151 = sphi 0, %s150
      %s165 = sphi 0, %s151
      %s169 = sphi 0, %s169
      %s171 = sphi 0, %s169
      %s172 = sphi 0, %s171
      %s186 = sphi 0, %s172
      %s190 = sphi 0, %s190
      %s192 = sphi 0, %s190
      %s193 = sphi 0, %s192
      %s207 = sphi 0, %s193
      %s211 = sphi 0, %s211
      %s213 = sphi 0, %s211
      %s214 = sphi 0, %s213
      %s228 = sphi 0, %s214
      %s232 = sphi 0, %s232
      %s234 = sphi 0, %s232
      %s235 = sphi 0, %s234
      %s249 = sphi 0, %s235
      %s253 = sphi 0, %s253
      %s255 = sphi 0, %s253
      %s256 = sphi 0, %s255
      %s270 = sphi 0, %s256
      %s274 = sphi 0, %s274
      %s276 = sphi 0, %s274
      %s277 = sphi 0, %s276
      %s291 = sphi 0, %s277
      %s295 = sphi 0, %s295
      %s297 = sphi 0, %s295
      %s298 = sphi 0, %s297
      %s312 = sphi 0, %s298
      %s320 = sphi 0, %s322
      %s323 = sphi 0, %s320
      %s324 = sphi 0, %s323
      %s340 = sphi 0, %s324
    $region4: #{tpu_custom_call.1} parent=1 // loop_header_branch
      %33 = sbr.rel (%p31) target = $region8
    $region5: #{tpu_custom_call.1} parent=1 // loop_body
      %s35 = ssub.s32 %s30, 1
      %s36 = ssub.s32 %s30, 2
      %s43 = sadd.s32 1, %s38
      %p44 = scmp.ge.s32.totalorder %s43, 1
      %s45 = scalar_select %p44, 0, %s43
      %s46 = sadd.s32 1, %s37
      %s47 = scalar_select %p44, %s46, %s37
      %p48 = scmp.ge.s32.totalorder %s47, 2
      %s49 = scalar_select %p48, 0, %s47
      %s50 = ssub.s32 %s37, %s49
      %s51 = ssub.s32 %s38, %s45
      %s52 = sor.u32 %s50, %s51
      %p53 = scmp.eq.s32.totalorder %s52, 0
      %s55 = sadd.s32 %s54, 1
      %s56 = scalar_select %p53, %s54, %s55
      %p59 = pneg %p53
      %p60 = scmp.eq.s32.totalorder %s30, 1
      %p61 = por %p59, %p60
      %p62 = scmp.ne.s32.totalorder %s54, %s57
      %p63 = scmp.eq.s32.totalorder %s30, 0
      %p64 = por %p62, %p63
      %p65 = scmp.ne.s32.totalorder %s54, %s57
      %p66 = scmp.eq.s32.totalorder %s35, 1
      %p67 = por %p65, %p66
      %p68 = scmp.ne.s32.totalorder %s57, %s58
      %p69 = scmp.eq.s32.totalorder %s35, 0
      %p70 = por %p68, %p69
      %p71 = scmp.ne.s32.totalorder %s57, %s58
      %p72 = scmp.eq.s32.totalorder %s36, 1
      %p73 = por %p71, %p72
      %p75 = scmp.ne.s32.totalorder %s58, %s74
      %p76 = scmp.eq.s32.totalorder %s36, 0
      %p77 = por %p75, %p76
      %s78 = ssub.s32 %s37, %s49
      %s79 = ssub.s32 %s38, %s45
      %s80 = sor.u32 %s78, %s79
      %p81 = scmp.eq.s32.totalorder %s80, 0
      %s83 = sadd.s32 %s82, 1
      %s84 = scalar_select %p81, %s82, %s83
      %p87 = pneg %p81
      %p88 = scmp.eq.s32.totalorder %s30, 1
      %p89 = por %p87, %p88
      %p90 = scmp.ne.s32.totalorder %s82, %s85
      %p91 = scmp.eq.s32.totalorder %s30, 0
      %p92 = por %p90, %p91
      %p93 = scmp.ne.s32.totalorder %s82, %s85
      %p94 = scmp.eq.s32.totalorder %s35, 1
      %p95 = por %p93, %p94
      %p96 = scmp.ne.s32.totalorder %s85, %s86
      %p97 = scmp.eq.s32.totalorder %s35, 0
      %p98 = por %p96, %p97
      %p99 = scmp.ne.s32.totalorder %s85, %s86
      %p100 = scmp.eq.s32.totalorder %s36, 1
      %p101 = por %p99, %p100
      %p103 = scmp.ne.s32.totalorder %s86, %s102
      %p104 = scmp.eq.s32.totalorder %s36, 0
      %p105 = por %p103, %p104
      %s107 = sadd.s32 %s106, 1
      %p110 = scmp.eq.s32.totalorder %s30, 1
      %p111 = scmp.ne.s32.totalorder %s106, %s108
      %p112 = scmp.eq.s32.totalorder %s30, 0
      %p113 = por %p111, %p112
      %p114 = scmp.ne.s32.totalorder %s106, %s108
      %p115 = scmp.eq.s32.totalorder %s35, 1
      %p116 = por %p114, %p115
      %p117 = scmp.ne.s32.totalorder %s108, %s109
      %p118 = scmp.eq.s32.totalorder %s35, 0
      %p119 = por %p117, %p118
      %p120 = scmp.ne.s32.totalorder %s108, %s109
      %p121 = scmp.eq.s32.totalorder %s36, 1
      %p122 = por %p120, %p121
      %p124 = scmp.ne.s32.totalorder %s109, %s123
      %p125 = scmp.eq.s32.totalorder %s36, 0
      %p126 = por %p124, %p125
      %s128 = sadd.s32 %s127, 1
      %p131 = scmp.eq.s32.totalorder %s30, 1
      %p132 = scmp.ne.s32.totalorder %s127, %s129
      %p133 = scmp.eq.s32.totalorder %s30, 0
      %p134 = por %p132, %p133
      %p135 = scmp.ne.s32.totalorder %s127, %s129
      %p136 = scmp.eq.s32.totalorder %s35, 1
      %p137 = por %p135, %p136
      %p138 = scmp.ne.s32.totalorder %s129, %s130
      %p139 = scmp.eq.s32.totalorder %s35, 0
      %p140 = por %p138, %p139
      %p141 = scmp.ne.s32.totalorder %s129, %s130
      %p142 = scmp.eq.s32.totalorder %s36, 1
      %p143 = por %p141, %p142
      %p145 = scmp.ne.s32.totalorder %s130, %s144
      %p146 = scmp.eq.s32.totalorder %s36, 0
      %p147 = por %p145, %p146
      %s149 = sadd.s32 %s148, 1
      %p152 = scmp.eq.s32.totalorder %s30, 1
      %p153 = scmp.ne.s32.totalorder %s148, %s150
      %p154 = scmp.eq.s32.totalorder %s30, 0
      %p155 = por %p153, %p154
      %p156 = scmp.ne.s32.totalorder %s148, %s150
      %p157 = scmp.eq.s32.totalorder %s35, 1
      %p158 = por %p156, %p157
      %p159 = scmp.ne.s32.totalorder %s150, %s151
      %p160 = scmp.eq.s32.totalorder %s35, 0
      %p161 = por %p159, %p160
      %p162 = scmp.ne.s32.totalorder %s150, %s151
      %p163 = scmp.eq.s32.totalorder %s36, 1
      %p164 = por %p162, %p163
      %p166 = scmp.ne.s32.totalorder %s151, %s165
      %p167 = scmp.eq.s32.totalorder %s36, 0
      %p168 = por %p166, %p167
      %s170 = sadd.s32 %s169, 1
      %p173 = scmp.eq.s32.totalorder %s30, 1
      %p174 = scmp.ne.s32.totalorder %s169, %s171
      %p175 = scmp.eq.s32.totalorder %s30, 0
      %p176 = por %p174, %p175
      %p177 = scmp.ne.s32.totalorder %s169, %s171
      %p178 = scmp.eq.s32.totalorder %s35, 1
      %p179 = por %p177, %p178
      %p180 = scmp.ne.s32.totalorder %s171, %s172
      %p181 = scmp.eq.s32.totalorder %s35, 0
      %p182 = por %p180, %p181
      %p183 = scmp.ne.s32.totalorder %s171, %s172
      %p184 = scmp.eq.s32.totalorder %s36, 1
      %p185 = por %p183, %p184
      %p187 = scmp.ne.s32.totalorder %s172, %s186
      %p188 = scmp.eq.s32.totalorder %s36, 0
      %p189 = por %p187, %p188
      %s191 = sadd.s32 %s190, 1
      %p194 = scmp.eq.s32.totalorder %s30, 1
      %p195 = scmp.ne.s32.totalorder %s190, %s192
      %p196 = scmp.eq.s32.totalorder %s30, 0
      %p197 = por %p195, %p196
      %p198 = scmp.ne.s32.totalorder %s190, %s192
      %p199 = scmp.eq.s32.totalorder %s35, 1
      %p200 = por %p198, %p199
      %p201 = scmp.ne.s32.totalorder %s192, %s193
      %p202 = scmp.eq.s32.totalorder %s35, 0
      %p203 = por %p201, %p202
      %p204 = scmp.ne.s32.totalorder %s192, %s193
      %p205 = scmp.eq.s32.totalorder %s36, 1
      %p206 = por %p204, %p205
      %p208 = scmp.ne.s32.totalorder %s193, %s207
      %p209 = scmp.eq.s32.totalorder %s36, 0
      %p210 = por %p208, %p209
      %s212 = sadd.s32 %s211, 1
      %p215 = scmp.eq.s32.totalorder %s30, 1
      %p216 = scmp.ne.s32.totalorder %s211, %s213
      %p217 = scmp.eq.s32.totalorder %s30, 0
      %p218 = por %p216, %p217
      %p219 = scmp.ne.s32.totalorder %s211, %s213
      %p220 = scmp.eq.s32.totalorder %s35, 1
      %p221 = por %p219, %p220
      %p222 = scmp.ne.s32.totalorder %s213, %s214
      %p223 = scmp.eq.s32.totalorder %s35, 0
      %p224 = por %p222, %p223
      %p225 = scmp.ne.s32.totalorder %s213, %s214
      %p226 = scmp.eq.s32.totalorder %s36, 1
      %p227 = por %p225, %p226
      %p229 = scmp.ne.s32.totalorder %s214, %s228
      %p230 = scmp.eq.s32.totalorder %s36, 0
      %p231 = por %p229, %p230
      %s233 = sadd.s32 %s232, 1
      %p236 = scmp.eq.s32.totalorder %s30, 1
      %p237 = scmp.ne.s32.totalorder %s232, %s234
      %p238 = scmp.eq.s32.totalorder %s30, 0
      %p239 = por %p237, %p238
      %p240 = scmp.ne.s32.totalorder %s232, %s234
      %p241 = scmp.eq.s32.totalorder %s35, 1
      %p242 = por %p240, %p241
      %p243 = scmp.ne.s32.totalorder %s234, %s235
      %p244 = scmp.eq.s32.totalorder %s35, 0
      %p245 = por %p243, %p244
      %p246 = scmp.ne.s32.totalorder %s234, %s235
      %p247 = scmp.eq.s32.totalorder %s36, 1
      %p248 = por %p246, %p247
      %p250 = scmp.ne.s32.totalorder %s235, %s249
      %p251 = scmp.eq.s32.totalorder %s36, 0
      %p252 = por %p250, %p251
      %s254 = sadd.s32 %s253, 1
      %p257 = scmp.eq.s32.totalorder %s30, 1
      %p258 = scmp.ne.s32.totalorder %s253, %s255
      %p259 = scmp.eq.s32.totalorder %s30, 0
      %p260 = por %p258, %p259
      %p261 = scmp.ne.s32.totalorder %s253, %s255
      %p262 = scmp.eq.s32.totalorder %s35, 1
      %p263 = por %p261, %p262
      %p264 = scmp.ne.s32.totalorder %s255, %s256
      %p265 = scmp.eq.s32.totalorder %s35, 0
      %p266 = por %p264, %p265
      %p267 = scmp.ne.s32.totalorder %s255, %s256
      %p268 = scmp.eq.s32.totalorder %s36, 1
      %p269 = por %p267, %p268
      %p271 = scmp.ne.s32.totalorder %s256, %s270
      %p272 = scmp.eq.s32.totalorder %s36, 0
      %p273 = por %p271, %p272
      %s275 = sadd.s32 %s274, 1
      %p278 = scmp.eq.s32.totalorder %s30, 1
      %p279 = scmp.ne.s32.totalorder %s274, %s276
      %p280 = scmp.eq.s32.totalorder %s30, 0
      %p281 = por %p279, %p280
      %p282 = scmp.ne.s32.totalorder %s274, %s276
      %p283 = scmp.eq.s32.totalorder %s35, 1
      %p284 = por %p282, %p283
      %p285 = scmp.ne.s32.totalorder %s276, %s277
      %p286 = scmp.eq.s32.totalorder %s35, 0
      %p287 = por %p285, %p286
      %p288 = scmp.ne.s32.totalorder %s276, %s277
      %p289 = scmp.eq.s32.totalorder %s36, 1
      %p290 = por %p288, %p289
      %p292 = scmp.ne.s32.totalorder %s277, %s291
      %p293 = scmp.eq.s32.totalorder %s36, 0
      %p294 = por %p292, %p293
      %s296 = sadd.s32 %s295, 1
      %p299 = scmp.eq.s32.totalorder %s30, 1
      %p300 = scmp.ne.s32.totalorder %s295, %s297
      %p301 = scmp.eq.s32.totalorder %s30, 0
      %p302 = por %p300, %p301
      %p303 = scmp.ne.s32.totalorder %s295, %s297
      %p304 = scmp.eq.s32.totalorder %s35, 1
      %p305 = por %p303, %p304
      %p306 = scmp.ne.s32.totalorder %s297, %s298
      %p307 = scmp.eq.s32.totalorder %s35, 0
      %p308 = por %p306, %p307
      %p309 = scmp.ne.s32.totalorder %s297, %s298
      %p310 = scmp.eq.s32.totalorder %s36, 1
      %p311 = por %p309, %p310
      %p313 = scmp.ne.s32.totalorder %s298, %s312
      %p314 = scmp.eq.s32.totalorder %s36, 0
      %p315 = por %p313, %p314
      %s316 = ssub.s32 %s37, %s49
      %s317 = ssub.s32 %s38, %s45
      %s318 = sor.u32 %s316, %s317
      %p319 = scmp.eq.s32.totalorder %s318, 0
      %s321 = sadd.s32 %s320, 1
      %s322 = scalar_select %p319, %s320, %s321
      %p325 = pneg %p319
      %p326 = scmp.eq.s32.totalorder %s30, 1
      %p327 = por %p325, %p326
      %p328 = scmp.ne.s32.totalorder %s320, %s323
      %p329 = scmp.eq.s32.totalorder %s30, 0
      %p330 = por %p328, %p329
      %p331 = scmp.ne.s32.totalorder %s320, %s323
      %p332 = scmp.eq.s32.totalorder %s35, 1
      %p333 = por %p331, %p332
      %p334 = scmp.ne.s32.totalorder %s323, %s324
      %p335 = scmp.eq.s32.totalorder %s35, 0
      %p336 = por %p334, %p335
      %p337 = scmp.ne.s32.totalorder %s323, %s324
      %p338 = scmp.eq.s32.totalorder %s36, 1
      %p339 = por %p337, %p338
      %p341 = scmp.ne.s32.totalorder %s324, %s340
      %p342 = scmp.eq.s32.totalorder %s36, 0
      %p343 = por %p341, %p342
      %p344 = scmp.le.s32.totalorder 1, %s30
      %p345 = scmp.lt.s32.totalorder %s30, 3
      %p346 = pnand %p344, %p345
      %p347 = pneg %p346
      // Predicated region
      $region9: #{tpu_custom_call.1} parent=5 // pred_check
        _
      $region10: #{tpu_custom_call.1} parent=5 // pred_check_branch
        %349 = sbr.rel (%p346) target = $region12
      $region11: #{tpu_custom_call.1} parent=5 // pred_region
        %s350 = ssub.s32 %s30, 1
        // Predicated region
        $region13: #{tpu_custom_call.1} parent=11 // pred_check
          %p351 = pneg %p119
        $region14: #{tpu_custom_call.1} parent=11 // pred_check_branch
          %353 = sbr.rel (%p351) target = $region16
        $region15: #{tpu_custom_call.1} parent=11 // pred_region
          %s355 = ssub.s32 256, 256
          %356 = vsyncadd [#allocation6], %s355
          %s357 = sshll.u32 [#allocation7], 4
          %s358 = int_to_ptr.vmem [resolvable:$true] %s357
          %363 = dma.hbm_to_vmem [thread:$0]  %s2, 256, %s358, [#allocation6], 64, 64, 4
        $region16: #{tpu_custom_call.1} parent=11 // pred_fallthru
          _
        // Predicated region
        $region17: #{tpu_custom_call.1} parent=11 // pred_check
          %p364 = pneg %p140
        $region18: #{tpu_custom_call.1} parent=11 // pred_check_branch
          %366 = sbr.rel (%p364) target = $region20
        $region19: #{tpu_custom_call.1} parent=11 // pred_region
          _
        $region20: #{tpu_custom_call.1} parent=11 // pred_fallthru
          _
        // Predicated region
        $region21: #{tpu_custom_call.1} parent=11 // pred_check
          %p367 = pneg %p161
        $region22: #{tpu_custom_call.1} parent=11 // pred_check_branch
          %369 = sbr.rel (%p367) target = $region24
        $region23: #{tpu_custom_call.1} parent=11 // pred_region
          _
        $region24: #{tpu_custom_call.1} parent=11 // pred_fallthru
          _
        // Predicated region
        $region25: #{tpu_custom_call.1} parent=11 // pred_check
          %p370 = pneg %p182
        $region26: #{tpu_custom_call.1} parent=11 // pred_check_branch
          %372 = sbr.rel (%p370) target = $region28
        $region27: #{tpu_custom_call.1} parent=11 // pred_region
          %s374 = ssub.s32 16, 16
          %375 = vsyncadd [#allocation9], %s374
          %s377 = sshll.u32 [#allocation8], 4
          %s378 = int_to_ptr.vmem [resolvable:$true] %s377
          %380 = dma.hbm_to_vmem [thread:$0]  %s5, 16, %s378, [#allocation9]
        $region28: #{tpu_custom_call.1} parent=11 // pred_fallthru
          _
        // Predicated region
        $region29: #{tpu_custom_call.1} parent=11 // pred_check
          %p381 = pneg %p203
        $region30: #{tpu_custom_call.1} parent=11 // pred_check_branch
          %383 = sbr.rel (%p381) target = $region32
        $region31: #{tpu_custom_call.1} parent=11 // pred_region
          %s385 = ssub.s32 64, 64
          %386 = vsyncadd [#allocation9], %s385
          %s388 = sshll.u32 [#allocation10], 4
          %s389 = int_to_ptr.vmem [resolvable:$true] %s388
          %391 = dma.hbm_to_vmem [thread:$0]  %s6, 64, %s389, [#allocation9]
        $region32: #{tpu_custom_call.1} parent=11 // pred_fallthru
          _
        // Predicated region
        $region33: #{tpu_custom_call.1} parent=11 // pred_check
          %p392 = pneg %p224
        $region34: #{tpu_custom_call.1} parent=11 // pred_check_branch
          %394 = sbr.rel (%p392) target = $region36
        $region35: #{tpu_custom_call.1} parent=11 // pred_region
          %s396 = ssub.s32 16, 16
          %397 = vsyncadd [#allocation12], %s396
          %s399 = sshll.u32 [#allocation11], 4
          %s400 = int_to_ptr.vmem [resolvable:$true] %s399
          %402 = dma.hbm_to_vmem [thread:$0]  %s7, 16, %s400, [#allocation12]
        $region36: #{tpu_custom_call.1} parent=11 // pred_fallthru
          _
        // Predicated region
        $region37: #{tpu_custom_call.1} parent=11 // pred_check
          %p403 = pneg %p245
        $region38: #{tpu_custom_call.1} parent=11 // pred_check_branch
          %405 = sbr.rel (%p403) target = $region40
        $region39: #{tpu_custom_call.1} parent=11 // pred_region
          %s407 = ssub.s32 256, 256
          %408 = vsyncadd [#allocation12], %s407
          %s409 = sshll.u32 [#allocation13], 4
          %s410 = int_to_ptr.vmem [resolvable:$true] %s409
          %415 = dma.hbm_to_vmem [thread:$0]  %s8, 256, %s410, [#allocation12], 64, 64, 4
        $region40: #{tpu_custom_call.1} parent=11 // pred_fallthru
          _
        // Predicated region
        $region41: #{tpu_custom_call.1} parent=11 // pred_check
          %p416 = pneg %p266
        $region42: #{tpu_custom_call.1} parent=11 // pred_check_branch
          %418 = sbr.rel (%p416) target = $region44
        $region43: #{tpu_custom_call.1} parent=11 // pred_region
          %s420 = ssub.s32 16, 16
          %421 = vsyncadd [#allocation15], %s420
          %s423 = sshll.u32 [#allocation14], 4
          %s424 = int_to_ptr.vmem [resolvable:$true] %s423
          %426 = dma.hbm_to_vmem [thread:$0]  %s9, 16, %s424, [#allocation15]
        $region44: #{tpu_custom_call.1} parent=11 // pred_fallthru
          _
        // Predicated region
        $region45: #{tpu_custom_call.1} parent=11 // pred_check
          %p427 = pneg %p287
        $region46: #{tpu_custom_call.1} parent=11 // pred_check_branch
          %429 = sbr.rel (%p427) target = $region48
        $region47: #{tpu_custom_call.1} parent=11 // pred_region
          _
        $region48: #{tpu_custom_call.1} parent=11 // pred_fallthru
          _
        // Predicated region
        $region49: #{tpu_custom_call.1} parent=11 // pred_check
          %p430 = pneg %p308
        $region50: #{tpu_custom_call.1} parent=11 // pred_check_branch
          %432 = sbr.rel (%p430) target = $region52
        $region51: #{tpu_custom_call.1} parent=11 // pred_region
          _
        $region52: #{tpu_custom_call.1} parent=11 // pred_fallthru
          _
      $region12: #{tpu_custom_call.1} parent=5 // pred_fallthru
        _
      %p433 = scmp.lt.s32.totalorder %s30, 2
      // Predicated region
      $region53: #{tpu_custom_call.1} parent=5 // pred_check
        %p434 = pneg %p433
      $region54: #{tpu_custom_call.1} parent=5 // pred_check_branch
        %436 = sbr.rel (%p434) target = $region56
      $region55: #{tpu_custom_call.1} parent=5 // pred_region
        // Predicated region
        $region57: #{tpu_custom_call.1} parent=55 // pred_check
          %p437 = pneg %p64
        $region58: #{tpu_custom_call.1} parent=55 // pred_check_branch
          %439 = sbr.rel (%p437) target = $region60
        $region59: #{tpu_custom_call.1} parent=55 // pred_region
          %s440 = sand.u32 %s54, 1
          %s441 = scalar_lea.sflag [#allocation3], %s440
          %s442 = sand.u32 %s54, 1
          %s443 = smul.addr %s442, 4
          %s444 = scalar_lea.vmem [#allocation2], %s443
          %s446 = ssub.s32 64, 64
          %447 = vsyncadd %s441, %s446
          %s448 = sadd.s32 %s38, %s37
          %s449 = smul.addr %s448, 64
          %s450 = scalar_lea.hbm %s0, %s449
          %s452 = sshll.u32 %s444, 4
          %s453 = int_to_ptr.vmem [resolvable:$true] %s452
          %455 = dma.hbm_to_vmem [thread:$0]  %s450, 64, %s453, %s441
        $region60: #{tpu_custom_call.1} parent=55 // pred_fallthru
          _
        // Predicated region
        $region61: #{tpu_custom_call.1} parent=55 // pred_check
          %p456 = pneg %p92
        $region62: #{tpu_custom_call.1} parent=55 // pred_check_branch
          %458 = sbr.rel (%p456) target = $region64
        $region63: #{tpu_custom_call.1} parent=55 // pred_region
          %s459 = sand.u32 %s30, 1
          %s460 = scalar_lea.sflag [#allocation6], %s459
          %s461 = sand.u32 %s82, 1
          %s462 = smul.addr %s461, 8
          %s463 = scalar_lea.vmem [#allocation5], %s462
          %s465 = ssub.s32 128, 128
          %466 = vsyncadd %s460, %s465
          %s467 = smul.addr %s38, 2
          %s468 = smul.addr %s37, 2
          %s469 = sadd.s32 %s467, %s468
          %s470 = smul.addr %s469, 64
          %s471 = scalar_lea.hbm %s1, %s470
          %s472 = sshll.u32 %s463, 4
          %s473 = int_to_ptr.vmem [resolvable:$true] %s472
          %478 = dma.hbm_to_vmem [thread:$0]  %s471, 128, %s473, %s460, 64, 64, 4
        $region64: #{tpu_custom_call.1} parent=55 // pred_fallthru
          _
      $region56: #{tpu_custom_call.1} parent=5 // pred_fallthru
        _
      %p479 = scmp.le.s32.totalorder 1, %s30
      %p480 = scmp.lt.s32.totalorder %s30, 3
      %p481 = pnand %p479, %p480
      %p482 = pneg %p481
      // Predicated region
      $region65: #{tpu_custom_call.1} parent=5 // pred_check
        _
      $region66: #{tpu_custom_call.1} parent=5 // pred_check_branch
        %484 = sbr.rel (%p481) target = $region68
      $region67: #{tpu_custom_call.1} parent=5 // pred_region
        %s485 = ssub.s32 %s30, 1
        %s486 = sand.u32 %s57, 1
        %s487 = scalar_lea.sflag [#allocation3], %s486
        %s488 = sand.u32 %s57, 1
        %s489 = smul.addr %s488, 4
        %s490 = scalar_lea.vmem [#allocation2], %s489
        // Predicated region
        $region69: #{tpu_custom_call.1} parent=67 // pred_check
          %p491 = pneg %p70
        $region70: #{tpu_custom_call.1} parent=67 // pred_check_branch
          %493 = sbr.rel (%p491) target = $region72
        $region71: #{tpu_custom_call.1} parent=67 // pred_region
          %494 = dma.done %s487, 64
        $region72: #{tpu_custom_call.1} parent=67 // pred_fallthru
          _
        %s495 = sand.u32 %s35, 1
        %s496 = scalar_lea.sflag [#allocation6], %s495
        %s497 = sand.u32 %s85, 1
        %s498 = smul.addr %s497, 8
        %s499 = scalar_lea.vmem [#allocation5], %s498
        // Predicated region
        $region73: #{tpu_custom_call.1} parent=67 // pred_check
          %p500 = pneg %p98
        $region74: #{tpu_custom_call.1} parent=67 // pred_check_branch
          %502 = sbr.rel (%p500) target = $region76
        $region75: #{tpu_custom_call.1} parent=67 // pred_region
          %503 = dma.done %s496, 128
        $region76: #{tpu_custom_call.1} parent=67 // pred_fallthru
          _
        // Predicated region
        $region77: #{tpu_custom_call.1} parent=67 // pred_check
          %p504 = pneg %p119
        $region78: #{tpu_custom_call.1} parent=67 // pred_check_branch
          %506 = sbr.rel (%p504) target = $region80
        $region79: #{tpu_custom_call.1} parent=67 // pred_region
          %507 = dma.done [#allocation6], 256
        $region80: #{tpu_custom_call.1} parent=67 // pred_fallthru
          _
        // Predicated region
        $region81: #{tpu_custom_call.1} parent=67 // pred_check
          %p508 = pneg %p182
        $region82: #{tpu_custom_call.1} parent=67 // pred_check_branch
          %510 = sbr.rel (%p508) target = $region84
        $region83: #{tpu_custom_call.1} parent=67 // pred_region
          %511 = dma.done [#allocation9], 16
        $region84: #{tpu_custom_call.1} parent=67 // pred_fallthru
          _
        // Predicated region
        $region85: #{tpu_custom_call.1} parent=67 // pred_check
          %p512 = pneg %p203
        $region86: #{tpu_custom_call.1} parent=67 // pred_check_branch
          %514 = sbr.rel (%p512) target = $region88
        $region87: #{tpu_custom_call.1} parent=67 // pred_region
          %515 = dma.done [#allocation9], 64
        $region88: #{tpu_custom_call.1} parent=67 // pred_fallthru
          _
        // Predicated region
        $region89: #{tpu_custom_call.1} parent=67 // pred_check
          %p516 = pneg %p224
        $region90: #{tpu_custom_call.1} parent=67 // pred_check_branch
          %518 = sbr.rel (%p516) target = $region92
        $region91: #{tpu_custom_call.1} parent=67 // pred_region
          %519 = dma.done [#allocation12], 16
        $region92: #{tpu_custom_call.1} parent=67 // pred_fallthru
          _
        // Predicated region
        $region93: #{tpu_custom_call.1} parent=67 // pred_check
          %p520 = pneg %p245
        $region94: #{tpu_custom_call.1} parent=67 // pred_check_branch
          %522 = sbr.rel (%p520) target = $region96
        $region95: #{tpu_custom_call.1} parent=67 // pred_region
          %523 = dma.done [#allocation12], 256
        $region96: #{tpu_custom_call.1} parent=67 // pred_fallthru
          _
        // Predicated region
        $region97: #{tpu_custom_call.1} parent=67 // pred_check
          %p524 = pneg %p266
        $region98: #{tpu_custom_call.1} parent=67 // pred_check_branch
          %526 = sbr.rel (%p524) target = $region100
        $region99: #{tpu_custom_call.1} parent=67 // pred_region
          %527 = dma.done [#allocation15], 16
        $region100: #{tpu_custom_call.1} parent=67 // pred_fallthru
          _
        %s528 = sand.u32 %s57, 1
        %s529 = scalar_lea.sflag [#allocation3], %s528
        %s530 = sand.u32 %s57, 1
        %s531 = smul.addr %s530, 4
        %s532 = scalar_lea.vmem [#allocation2], %s531
        %p533 = pneg %p70
        %p534 = pneg %p67
        %s535 = sand.u32 %s35, 1
        %s536 = scalar_lea.sflag [#allocation6], %s535
        %s537 = sand.u32 %s85, 1
        %s538 = smul.addr %s537, 8
        %s539 = scalar_lea.vmem [#allocation5], %s538
        %p540 = pneg %p98
        %p541 = pneg %p95
        %p542 = pneg %p119
        %p543 = pneg %p116
        %p544 = pneg %p140
        %p545 = pneg %p137
        %p546 = pneg %p161
        %p547 = pneg %p158
        %p548 = pneg %p182
        %p549 = pneg %p179
        %p550 = pneg %p203
        %p551 = pneg %p200
        %p552 = pneg %p224
        %p553 = pneg %p221
        %p554 = pneg %p245
        %p555 = pneg %p242
        %p556 = pneg %p266
        %p557 = pneg %p263
        %p558 = pneg %p287
        %p559 = pneg %p284
        %p560 = pneg %p308
        %p561 = pneg %p305
        %p562 = pneg %p336
        %p563 = pneg %p333
        %s564 = sand.u32 %s323, 1
        %s565 = scalar_lea.sflag [#allocation4], %s564
        %s566 = sand.u32 %s323, 1
        %s567 = smul.addr %s566, 8
        %s568 = scalar_lea.vmem [#allocation16], %s567
        %s570 = smul.u32 %s40, 8
        %v571 = vld [vmem:[%s490] sm:$0xf]
        %v572 = vld [vmem:[#allocation7] sm:$0xf]
        %v573 = vld [vmem:[#allocation7 + $0x4] sm:$0xf]
        %v574 = vld [vmem:[#allocation7 + $0x8] sm:$0xf]
        %v575 = vld [vmem:[#allocation7 + $0xc] sm:$0xf]
        %v576 = vld [vmem:[%s3] sm:$0x1]
        %v578 = vlaneseq
        %v579 = vshrl.u32 %v578, 7
        %v580 = vsub.s32 0, %v579
        %v581 = vrot.slane %v576, %v580
        %v587 = vunpack.c.l.b16 %v572
        %v588 = vunpack.c.l.b16 %v573
        %v589 = vunpack.c.l.b16 %v574
        %v590 = vunpack.c.l.b16 %v575
        %v591 = vpack.c.b16 %v588, %v587
        %v592 = vpack.c.b16 %v590, %v589
        %vm595 = vcmask 261120
        %v597 = vsel %vm595, %v571, 0
        %599 = vmatprep.subr.bf16.mxu0 0
        %600 = vmatpush1.bf16.msra.mxu0 0
        %601 = vmatprep.subr.bf16.mxu0 0
        %602 = vmatpush1.bf16.msra.mxu0 0
        %603 = vmatprep.subr.bf16.mxu0 0
        %604 = vmatpush1.bf16.msra.mxu0 0
        %605 = vmatprep.subr.bf16.mxu0 0
        %606 = vmatpush1.bf16.msra.mxu0 0
        %607 = vmatprep.subr.bf16.mxu0 0
        %608 = vmatpush1.bf16.msra.mxu0 0
        %609 = vmatprep.subr.bf16.mxu0 0
        %610 = vmatpush1.bf16.msra.mxu0 0
        %611 = vmatprep.subr.bf16.mxu0 0
        %612 = vmatpush1.bf16.msra.mxu0 %v592
        %613 = vmatprep.subr.bf16.mxu0 0
        %614 = vmatpush1.bf16.msra.mxu0 %v591
        %615 = vmatprep.subr.bf16.mxu0 0
        %616 = vmatpush2.bf16.msra.mxu0 0
        %617 = vmatprep.subr.bf16.mxu0 0
        %618 = vmatpush2.bf16.msra.mxu0 0
        %619 = vmatprep.subr.bf16.mxu0 0
        %620 = vmatpush2.bf16.msra.mxu0 0
        %621 = vmatprep.subr.bf16.mxu0 0
        %622 = vmatpush2.bf16.msra.mxu0 0
        %623 = vmatprep.subr.bf16.mxu0 0
        %624 = vmatpush2.bf16.msra.mxu0 0
        %625 = vmatprep.subr.bf16.mxu0 0
        %626 = vmatpush2.bf16.msra.mxu0 0
        %627 = vmatprep.subr.bf16.mxu0 0
        %628 = vmatpush2.bf16.msra.mxu0 0
        %629 = vmatprep.subr.bf16.mxu0 0
        %630 = vmatpush2.bf16.msra.mxu0 0
        %631 = vmatprep.mubr.bf16.mxu0 0
        %632 = vmatmul.mubr.bf16.gmra.mxu0 %v597
        %v633 = vpop.f32.mrf.mxu0
        %v634 = vadd.f32 %v581, %v633
        %v635 = vpop.f32.mrf.mxu0
        %v636 = vpop.f32.mrf.mxu0
        %v637 = vpop.f32.mrf.mxu0
        %638 = vdwg.mxu0
        %v639 = vmul.f32 %v634, %v634
        %v640 = vmul.f32 %v634, %v639
        %v641 = vmul.f32 %v640, 0.044715
        %v642 = vadd.f32 %v634, %v641
        %v643 = vmul.f32 %v642, 0.7978846
        %v644 = vtanh.pop %v643
        %v645 = vadd.f32 %v644, 1.0
        %v646 = vmul.f32 %v645, 0.5
        %v647 = vmul.f32 %v634, %v646
        %649 = vrot.lane.b32.xlu0 %v647, 96
        %v650 = vpop.permute.xlu0 %649
        %v652 = vsel %vm595, %v650, 0.0
        %653 = vadd.xlane.f32.xlu0 %v652
        %v654 = vpop.xlane.xlu0 %653
        %v655 = vrcp.pop 32.0
        %v656 = vmul.f32 %v654, %v655
        %v657 = vsub.f32 %v647, %v656
        %v658 = vmul.f32 %v657, %v657
        %660 = vrot.lane.b32.xlu0 %v658, 96
        %v661 = vpop.permute.xlu0 %660
        %v663 = vsel %vm595, %v661, 0.0
        %664 = vadd.xlane.f32.xlu0 %v663
        %v665 = vpop.xlane.xlu0 %664
        %v666 = vmul.f32 %v665, %v655
        %v667 = vadd.f32 %v666, 1e-05
        %v668 = vrsqrt.pop %v667
        %v669 = vmul.f32 %v657, %v668
        %v670 = vld [vmem:[%s4] sm:$0x1]
        %v672 = vlaneseq
        %v673 = vshrl.u32 %v672, 7
        %v674 = vsub.s32 0, %v673
        %v675 = vrot.slane %v670, %v674
        %676 = vrot.lane.b32.xlu0 %v675, 32
        %v677 = vpop.permute.xlu0 %676
        %v679 = vmul.f32 %v669, %v677
        %v680 = vld [vmem:[#allocation8] sm:$0x1]
        %v682 = vlaneseq
        %v683 = vshrl.u32 %v682, 7
        %v684 = vsub.s32 0, %v683
        %v685 = vrot.slane %v680, %v684
        %686 = vrot.lane.b32.xlu0 %v685, 32
        %v687 = vpop.permute.xlu0 %686
        %v689 = vadd.f32 %v679, %v687
        %v690 = vld [vmem:[%s499] sm:$0xf]
        %v691 = vld [vmem:[%s499 + $0x4] sm:$0xf]
        %v694 = vunpack.c.l.b16 %v690
        %v695 = vunpack.c.l.b16 %v691
        %v696 = vpack.c.b16 %v695, %v694
        %v698 = vsel %vm595, %v696, 0
        %700 = vmatprep.subr.bf16.mxu0 0
        %701 = vmatpush1.bf16.msra.mxu0 0
        %702 = vmatprep.subr.bf16.mxu0 0
        %703 = vmatpush1.bf16.msra.mxu0 0
        %704 = vmatprep.subr.bf16.mxu0 0
        %705 = vmatpush1.bf16.msra.mxu0 0
        %706 = vmatprep.subr.bf16.mxu0 0
        %707 = vmatpush1.bf16.msra.mxu0 0
        %708 = vmatprep.subr.bf16.mxu0 0
        %709 = vmatpush1.bf16.msra.mxu0 0
        %710 = vmatprep.subr.bf16.mxu0 0
        %711 = vmatpush1.bf16.msra.mxu0 0
        %712 = vmatprep.subr.bf16.mxu0 0
        %713 = vmatpush1.bf16.msra.mxu0 %v592
        %714 = vmatprep.subr.bf16.mxu0 0
        %715 = vmatpush1.bf16.msra.mxu0 %v591
        %716 = vmatprep.subr.bf16.mxu0 0
        %717 = vmatpush2.bf16.msra.mxu0 0
        %718 = vmatprep.subr.bf16.mxu0 0
        %719 = vmatpush2.bf16.msra.mxu0 0
        %720 = vmatprep.subr.bf16.mxu0 0
        %721 = vmatpush2.bf16.msra.mxu0 0
        %722 = vmatprep.subr.bf16.mxu0 0
        %723 = vmatpush2.bf16.msra.mxu0 0
        %724 = vmatprep.subr.bf16.mxu0 0
        %725 = vmatpush2.bf16.msra.mxu0 0
        %726 = vmatprep.subr.bf16.mxu0 0
        %727 = vmatpush2.bf16.msra.mxu0 0
        %728 = vmatprep.subr.bf16.mxu0 0
        %729 = vmatpush2.bf16.msra.mxu0 0
        %730 = vmatprep.subr.bf16.mxu0 0
        %731 = vmatpush2.bf16.msra.mxu0 0
        %732 = vmatprep.mubr.bf16.mxu0 0
        %733 = vmatmul.mubr.bf16.gmra.mxu0 %v698
        %v734 = vpop.f32.mrf.mxu0
        %v735 = vadd.f32 %v581, %v734
        %v736 = vpop.f32.mrf.mxu0
        %v737 = vpop.f32.mrf.mxu0
        %v738 = vadd.f32 %v581, %v737
        %v739 = vpop.f32.mrf.mxu0
        %740 = vdwg.mxu0
        %v741 = vmul.f32 %v735, %v735
        %v742 = vmul.f32 %v738, %v738
        %v743 = vmul.f32 %v735, %v741
        %v744 = vmul.f32 %v738, %v742
        %v745 = vmul.f32 %v743, 0.044715
        %v746 = vmul.f32 %v744, 0.044715
        %v747 = vadd.f32 %v735, %v745
        %v748 = vadd.f32 %v738, %v746
        %v749 = vmul.f32 %v747, 0.7978846
        %v750 = vmul.f32 %v748, 0.7978846
        %v751 = vtanh.pop %v749
        %v752 = vtanh.pop %v750
        %v753 = vadd.f32 %v751, 1.0
        %v754 = vadd.f32 %v752, 1.0
        %v755 = vmul.f32 %v753, 0.5
        %v756 = vmul.f32 %v754, 0.5
        %v757 = vmul.f32 %v735, %v755
        %v758 = vmul.f32 %v738, %v756
        %761 = vrot.lane.b32.xlu0 %v757, 96
        %v762 = vpop.permute.xlu0 %761
        %763 = vrot.lane.b32.xlu0 %v758, 96
        %v764 = vpop.permute.xlu0 %763
        %v767 = vsel %vm595, %v762, 0.0
        %768 = vadd.xlane.f32.xlu0 %v767
        %v769 = vpop.xlane.xlu0 %768
        %v770 = vsel %vm595, %v764, 0.0
        %771 = vadd.xlane.f32.xlu0 %v770
        %v772 = vpop.xlane.xlu0 %771
        %v773 = vmul.f32 %v769, %v655
        %v774 = vmul.f32 %v772, %v655
        %v775 = vsub.f32 %v757, %v773
        %v776 = vsub.f32 %v758, %v774
        %v777 = vmul.f32 %v775, %v775
        %v778 = vmul.f32 %v776, %v776
        %781 = vrot.lane.b32.xlu0 %v777, 96
        %v782 = vpop.permute.xlu0 %781
        %783 = vrot.lane.b32.xlu0 %v778, 96
        %v784 = vpop.permute.xlu0 %783
        %v787 = vsel %vm595, %v782, 0.0
        %788 = vadd.xlane.f32.xlu0 %v787
        %v789 = vpop.xlane.xlu0 %788
        %v790 = vsel %vm595, %v784, 0.0
        %791 = vadd.xlane.f32.xlu0 %v790
        %v792 = vpop.xlane.xlu0 %791
        %v793 = vmul.f32 %v789, %v655
        %v794 = vmul.f32 %v792, %v655
        %v795 = vadd.f32 %v793, 1e-05
        %v796 = vadd.f32 %v794, 1e-05
        %v797 = vrsqrt.pop %v795
        %v798 = vrsqrt.pop %v796
        %v799 = vmul.f32 %v775, %v797
        %v800 = vmul.f32 %v776, %v798
        %v801 = vmul.f32 %v799, %v677
        %v802 = vmul.f32 %v800, %v677
        %v803 = vadd.f32 %v801, %v687
        %v804 = vadd.f32 %v802, %v687
        %p805 = scmp.gt.s32.totalorder %s40, 0
        %s806 = scalar_select %p805, 1, 0
        %v807 = vstv %s806
        %vm808 = vcmp.eq.s32.totalorder %v807, 1
        %v809 = vsel %vm808, %v803, 0.0
        %v810 = vlaneseq
        %v811 = vshrl.u32 %v810, 7
        %s812 = sadd.s32 %s570, 8
        %v813 = vstv %s812
        %v814 = vadd.s32 %v813, %v811
        %vm815 = vcmp.lt.s32.totalorder %v814, 8
        %v816 = vsel %vm815, 1, 0
        %vm817 = vcmp.eq.s32.totalorder %v816, 1
        %v818 = vsel %vm817, %v804, 0.0
        %v820 = vrot.slane %v689, 7
        %v823 = vrot.slane %v818, 7
        %vm825 = vcmask 1040384
        %v826 = vsel %vm825, %v809, %v820
        %v827 = vsel %vm825, %v820, %v823
        %v828 = vld [vmem:[#allocation10] sm:$0x1]
        %v829 = vlaneseq
        %v830 = vshrl.u32 %v829, 7
        %v831 = vsub.s32 0, %v830
        %v832 = vrot.slane %v828, %v831
        %834 = vrot.lane.b32.xlu0 %v832, 32
        %v835 = vpop.permute.xlu0 %834
        %v837 = vmul.f32 %v826, %v835
        %v838 = vld [vmem:[#allocation10 + $0x1] sm:$0x1]
        %v839 = vlaneseq
        %v840 = vshrl.u32 %v839, 7
        %v841 = vsub.s32 0, %v840
        %v842 = vrot.slane %v838, %v841
        %844 = vrot.lane.b32.xlu0 %v842, 32
        %v845 = vpop.permute.xlu0 %844
        %v847 = vmul.f32 %v826, %v845
        %v848 = vmul.f32 %v827, %v845
        %vm851 = vcmask 1046528
        %v852 = vrot.slane %v847, 1
        %v853 = vrot.slane %v848, 1
        %v854 = vsel %vm851, %v852, %v853
        %v856 = vadd.f32 %v837, %v854
        %v857 = vld [vmem:[#allocation10 + $0x2] sm:$0x1]
        %v858 = vlaneseq
        %v859 = vshrl.u32 %v858, 7
        %v860 = vsub.s32 0, %v859
        %v861 = vrot.slane %v857, %v860
        %863 = vrot.lane.b32.xlu0 %v861, 32
        %v864 = vpop.permute.xlu0 %863
        %v866 = vmul.f32 %v826, %v864
        %v867 = vmul.f32 %v827, %v864
        %vm870 = vcmask 1045504
        %v871 = vrot.slane %v866, 2
        %v872 = vrot.slane %v867, 2
        %v873 = vsel %vm870, %v871, %v872
        %v875 = vadd.f32 %v856, %v873
        %v876 = vld [vmem:[#allocation11] sm:$0x1]
        %v878 = vlaneseq
        %v879 = vshrl.u32 %v878, 7
        %v880 = vsub.s32 0, %v879
        %v881 = vrot.slane %v876, %v880
        %882 = vrot.lane.b32.xlu0 %v881, 32
        %v883 = vpop.permute.xlu0 %882
        %v885 = vadd.f32 %v875, %v883
        %v886 = vpack.c.bf16 %v885, %v885
        %v887 = vld [vmem:[#allocation13] sm:$0xf]
        %v888 = vld [vmem:[#allocation13 + $0x4] sm:$0xf]
        %v889 = vld [vmem:[#allocation13 + $0x8] sm:$0xf]
        %v890 = vld [vmem:[#allocation13 + $0xc] sm:$0xf]
        %v891 = vld [vmem:[#allocation14] sm:$0x1]
        %v893 = vlaneseq
        %v894 = vshrl.u32 %v893, 7
        %v895 = vsub.s32 0, %v894
        %v896 = vrot.slane %v891, %v895
        %899 = vrot.lane.b32.xlu0 %v886, 96
        %v900 = vpop.permute.xlu0 %899
        %v905 = vunpack.c.l.b16 %v887
        %v906 = vunpack.c.l.b16 %v888
        %v907 = vunpack.c.l.b16 %v889
        %v908 = vunpack.c.l.b16 %v890
        %v909 = vpack.c.b16 %v906, %v905
        %v910 = vpack.c.b16 %v908, %v907
        %v914 = vsel %vm595, %v900, 0
        %916 = vmatprep.subr.bf16.mxu0 0
        %917 = vmatpush1.bf16.msra.mxu0 0
        %918 = vmatprep.subr.bf16.mxu0 0
        %919 = vmatpush1.bf16.msra.mxu0 0
        %920 = vmatprep.subr.bf16.mxu0 0
        %921 = vmatpush1.bf16.msra.mxu0 0
        %922 = vmatprep.subr.bf16.mxu0 0
        %923 = vmatpush1.bf16.msra.mxu0 0
        %924 = vmatprep.subr.bf16.mxu0 0
        %925 = vmatpush1.bf16.msra.mxu0 0
        %926 = vmatprep.subr.bf16.mxu0 0
        %927 = vmatpush1.bf16.msra.mxu0 0
        %928 = vmatprep.subr.bf16.mxu0 0
        %929 = vmatpush1.bf16.msra.mxu0 %v910
        %930 = vmatprep.subr.bf16.mxu0 0
        %931 = vmatpush1.bf16.msra.mxu0 %v909
        %932 = vmatprep.subr.bf16.mxu0 0
        %933 = vmatpush2.bf16.msra.mxu0 0
        %934 = vmatprep.subr.bf16.mxu0 0
        %935 = vmatpush2.bf16.msra.mxu0 0
        %936 = vmatprep.subr.bf16.mxu0 0
        %937 = vmatpush2.bf16.msra.mxu0 0
        %938 = vmatprep.subr.bf16.mxu0 0
        %939 = vmatpush2.bf16.msra.mxu0 0
        %940 = vmatprep.subr.bf16.mxu0 0
        %941 = vmatpush2.bf16.msra.mxu0 0
        %942 = vmatprep.subr.bf16.mxu0 0
        %943 = vmatpush2.bf16.msra.mxu0 0
        %944 = vmatprep.subr.bf16.mxu0 0
        %945 = vmatpush2.bf16.msra.mxu0 0
        %946 = vmatprep.subr.bf16.mxu0 0
        %947 = vmatpush2.bf16.msra.mxu0 0
        %948 = vmatprep.mubr.bf16.mxu0 0
        %949 = vmatmul.mubr.bf16.gmra.mxu0 %v914
        %v950 = vpop.f32.mrf.mxu0
        %v951 = vadd.f32 %v896, %v950
        %v952 = vpop.f32.mrf.mxu0
        %v953 = vpop.f32.mrf.mxu0
        %v954 = vpop.f32.mrf.mxu0
        %955 = vdwg.mxu0
        %v956 = vmul.f32 %v647, %v951
        %v957 = vpack.c.bf16 %v956, %v956
        %v958 = vld [vmem:[%s10] sm:$0xf]
        %v959 = vld [vmem:[%s10 + $0x4] sm:$0xf]
        %v960 = vld [vmem:[%s10 + $0x8] sm:$0xf]
        %v961 = vld [vmem:[%s10 + $0xc] sm:$0xf]
        %v962 = vld [vmem:[%s11] sm:$0x1]
        %v964 = vlaneseq
        %v965 = vshrl.u32 %v964, 7
        %v966 = vsub.s32 0, %v965
        %v967 = vrot.slane %v962, %v966
        %v973 = vunpack.c.l.b16 %v958
        %v974 = vunpack.c.l.b16 %v959
        %v975 = vunpack.c.l.b16 %v960
        %v976 = vunpack.c.l.b16 %v961
        %v977 = vpack.c.b16 %v974, %v973
        %v978 = vpack.c.b16 %v976, %v975
        %v982 = vsel %vm595, %v957, 0
        %984 = vmatprep.subr.bf16.mxu0 0
        %985 = vmatpush1.bf16.msra.mxu0 0
        %986 = vmatprep.subr.bf16.mxu0 0
        %987 = vmatpush1.bf16.msra.mxu0 0
        %988 = vmatprep.subr.bf16.mxu0 0
        %989 = vmatpush1.bf16.msra.mxu0 0
        %990 = vmatprep.subr.bf16.mxu0 0
        %991 = vmatpush1.bf16.msra.mxu0 0
        %992 = vmatprep.subr.bf16.mxu0 0
        %993 = vmatpush1.bf16.msra.mxu0 0
        %994 = vmatprep.subr.bf16.mxu0 0
        %995 = vmatpush1.bf16.msra.mxu0 0
        %996 = vmatprep.subr.bf16.mxu0 0
        %997 = vmatpush1.bf16.msra.mxu0 %v978
        %998 = vmatprep.subr.bf16.mxu0 0
        %999 = vmatpush1.bf16.msra.mxu0 %v977
        %1000 = vmatprep.subr.bf16.mxu0 0
        %1001 = vmatpush2.bf16.msra.mxu0 0
        %1002 = vmatprep.subr.bf16.mxu0 0
        %1003 = vmatpush2.bf16.msra.mxu0 0
        %1004 = vmatprep.subr.bf16.mxu0 0
        %1005 = vmatpush2.bf16.msra.mxu0 0
        %1006 = vmatprep.subr.bf16.mxu0 0
        %1007 = vmatpush2.bf16.msra.mxu0 0
        %1008 = vmatprep.subr.bf16.mxu0 0
        %1009 = vmatpush2.bf16.msra.mxu0 0
        %1010 = vmatprep.subr.bf16.mxu0 0
        %1011 = vmatpush2.bf16.msra.mxu0 0
        %1012 = vmatprep.subr.bf16.mxu0 0
        %1013 = vmatpush2.bf16.msra.mxu0 0
        %1014 = vmatprep.subr.bf16.mxu0 0
        %1015 = vmatpush2.bf16.msra.mxu0 0
        %1016 = vmatprep.mubr.bf16.mxu0 0
        %1017 = vmatmul.mubr.bf16.gmra.mxu0 %v982
        %v1018 = vpop.f32.mrf.mxu0
        %v1019 = vadd.f32 %v967, %v1018
        %v1020 = vpop.f32.mrf.mxu0
        %v1021 = vpop.f32.mrf.mxu0
        %v1022 = vpop.f32.mrf.mxu0
        %1023 = vdwg.mxu0
        %1024 = vst.msk [vmem:[%s568] sm:$0xff] %vm595, %v1019
        %s1025 = sand.u32 %s323, 1
        %s1026 = scalar_lea.sflag [#allocation4], %s1025
        %s1027 = sand.u32 %s323, 1
        %s1028 = smul.addr %s1027, 8
        %s1029 = scalar_lea.vmem [#allocation16], %s1028
        // Predicated region
        $region101: #{tpu_custom_call.1} parent=67 // pred_check
          %p1030 = pneg %p333
        $region102: #{tpu_custom_call.1} parent=67 // pred_check_branch
          %1032 = sbr.rel (%p1030) target = $region104
        $region103: #{tpu_custom_call.1} parent=67 // pred_region
          %s1034 = ssub.s32 128, 128
          %1035 = vsyncadd %s1026, %s1034
          %s1036 = sadd.s32 %s40, %s39
          %s1037 = smul.addr %s1036, 128
          %s1038 = scalar_lea.hbm %s12, %s1037
          %s1040 = sshll.u32 %s1029, 4
          %s1041 = int_to_ptr.vmem [resolvable:$true] %s1040
          %1043 = dma.vmem_to_hbm [thread:$0]  %s1041, 128, %s1038, %s1026
        $region104: #{tpu_custom_call.1} parent=67 // pred_fallthru
          _
      $region68: #{tpu_custom_call.1} parent=5 // pred_fallthru
        _
      %p1044 = scmp.le.s32.totalorder 2, %s30
      // Predicated region
      $region105: #{tpu_custom_call.1} parent=5 // pred_check
        %p1045 = pneg %p1044
      $region106: #{tpu_custom_call.1} parent=5 // pred_check_branch
        %1047 = sbr.rel (%p1045) target = $region108
      $region107: #{tpu_custom_call.1} parent=5 // pred_region
        %s1048 = ssub.s32 %s30, 2
        // Predicated region
        $region109: #{tpu_custom_call.1} parent=107 // pred_check
          %p1049 = pneg %p339
        $region110: #{tpu_custom_call.1} parent=107 // pred_check_branch
          %1051 = sbr.rel (%p1049) target = $region112
        $region111: #{tpu_custom_call.1} parent=107 // pred_region
          %s1052 = sand.u32 %s324, 1
          %s1053 = scalar_lea.sflag [#allocation4], %s1052
          %s1054 = sand.u32 %s324, 1
          %s1055 = smul.addr %s1054, 8
          %s1056 = scalar_lea.vmem [#allocation16], %s1055
          %1057 = dma.done %s1053, 128
        $region112: #{tpu_custom_call.1} parent=107 // pred_fallthru
          _
      $region108: #{tpu_custom_call.1} parent=5 // pred_fallthru
        _
    $region6: #{tpu_custom_call.1} parent=1 // loop_footer
      %s34 = sadd.s32 1, %s30
    $region7: #{tpu_custom_call.1} parent=1 // loop_footer_branch
      %29 = sbr.rel target = $region3
    $region8: #{tpu_custom_call.1} parent=1 // loop_exit
      _
    %1058 = vsyncpa [#allocation3], 1
    %s1059 = scalar_lea.sflag [#allocation3], 1
    %1060 = vsyncpa %s1059, 1
    %1061 = vsyncpa [#allocation6], 1
    %s1062 = scalar_lea.sflag [#allocation6], 1
    %1063 = vsyncpa %s1062, 1
    %1064 = vsyncpa [#allocation9], 1
    %1065 = vsyncpa [#allocation12], 1
    %1066 = vsyncpa [#allocation15], 1
    %1067 = vsyncpa [#allocation4], 1
    %s1068 = scalar_lea.sflag [#allocation4], 1
    %1069 = vsyncpa %s1068, 1

// kernel: tpu_custom_call.1
$region0: #{tpu_custom_call.1}
  #allocation0 [shape = 'u32[]', space=smem, size = 0x4, offset = 0x4, fixed_abs, tag = 'smem constant byte address 0x4 - core index']
  #allocation1 [shape = 'u32[144,128]{1,0:T(1,128)}', space=vmem, size = 0x12000, scoped, tag = 'internal scratch']
  %s0 = inlined_call_operand.hbm [shape: bf16[2,8,32], index: 0, kind: input, shape index: {}]
  %s1 = inlined_call_operand.hbm [shape: bf16[2,1,16,32], index: 1, kind: input, shape index: {}]
  %s2 = inlined_call_operand.hbm [shape: bf16[32,64], index: 2, kind: input, shape index: {}]
  %s3 = inlined_call_operand.vmem [shape: f32[1,64], index: 3, kind: input, shape index: {}]
  %s4 = inlined_call_operand.vmem [shape: f32[1,32], index: 4, kind: input, shape index: {}]
  %s5 = inlined_call_operand.hbm [shape: f32[1,32], index: 5, kind: input, shape index: {}]
  %s6 = inlined_call_operand.hbm [shape: f32[3,32], index: 6, kind: input, shape index: {}]
  %s7 = inlined_call_operand.hbm [shape: f32[1,32], index: 7, kind: input, shape index: {}]
  %s8 = inlined_call_operand.hbm [shape: bf16[32,32], index: 8, kind: input, shape index: {}]
  %s9 = inlined_call_operand.hbm [shape: f32[1,32], index: 9, kind: input, shape index: {}]
  %s10 = inlined_call_operand.vmem [shape: bf16[32,32], index: 10, kind: input, shape index: {}]
  %s11 = inlined_call_operand.vmem [shape: f32[1,32], index: 11, kind: input, shape index: {}]
  %s12 = inlined_call_operand.hbm [shape: f32[2,8,32], index: 12, kind: output, shape index: {}]
  %s13 = sld [smem:[#allocation0]]
  $region113: #{tpu_custom_call.1} parent=0
    _
  %s15 = ssub.s32 1, %s13
  %s16 = scalar_select 0, %s15, %s13
  $region1: #{tpu_custom_call.1} parent=0
    #allocation2 [shape = 'u8[4096]{0}', space=vmem, size = 0x1000, scoped, tag = 'input window, operand 0']
    #allocation3 [shape = 's32[2]{0}', space=sflag, size = 0x8, scoped, tag = 'scoped memory for tpu_custom_call.1']
    #allocation4 [shape = 's32[2]{0}', space=sflag, size = 0x8, scoped, tag = 'scoped memory for tpu_custom_call.1']
    #allocation5 [shape = 'u8[8192]{0}', space=vmem, size = 0x2000, scoped, tag = 'input window, operand 1']
    #allocation6 [shape = 's32[2]{0}', space=sflag, size = 0x8, scoped, tag = 'scoped memory for tpu_custom_call.1']
    #allocation7 [shape = 'u8[8192]{0}', space=vmem, size = 0x2000, scoped, tag = 'input window, operand 2, single buffered']
    #allocation8 [shape = 'u8[512]{0}', space=vmem, size = 0x400, scoped, tag = 'input window, operand 5, single buffered']
    #allocation9 [shape = 's32[1]{0}', space=sflag, size = 0x4, scoped, tag = 'scoped memory for tpu_custom_call.1']
    #allocation10 [shape = 'u8[2048]{0}', space=vmem, size = 0x800, scoped, tag = 'input window, operand 6, single buffered']
    #allocation11 [shape = 'u8[512]{0}', space=vmem, size = 0x400, scoped, tag = 'input window, operand 7, single buffered']
    #allocation12 [shape = 's32[1]{0}', space=sflag, size = 0x4, scoped, tag = 'scoped memory for tpu_custom_call.1']
    #allocation13 [shape = 'u8[8192]{0}', space=vmem, size = 0x2000, scoped, tag = 'input window, operand 8, single buffered']
    #allocation14 [shape = 'u8[512]{0}', space=vmem, size = 0x400, scoped, tag = 'input window, operand 9, single buffered']
    #allocation15 [shape = 's32[1]{0}', space=sflag, size = 0x4, scoped, tag = 'scoped memory for tpu_custom_call.1']
    #allocation16 [shape = 'u8[8192]{0}', space=vmem, size = 0x2000, scoped, tag = 'output window, operand 0']
    %17 = vsyncpa [#allocation3], 0
    %s18 = scalar_lea.sflag [#allocation3], 1
    %19 = vsyncpa %s18, 0
    %20 = vsyncpa [#allocation6], 0
    %s21 = scalar_lea.sflag [#allocation6], 1
    %22 = vsyncpa %s21, 0
    %23 = vsyncpa [#allocation9], 0
    %24 = vsyncpa [#allocation12], 0
    %25 = vsyncpa [#allocation15], 0
    %26 = vsyncpa [#allocation4], 0
    %s27 = scalar_lea.sflag [#allocation4], 1
    %28 = vsyncpa %s27, 0
    loop: start=0, step=1, limit=4
    $region2: #{tpu_custom_call.1} parent=1 // loop_pre_header
      _
    $region3: #{tpu_custom_call.1} parent=1 // loop_header
      %s30 = sphi 0, %s34
      %p31 = scmp.ge.s32.totalorder %s30, 4
      %s37 = sphi 0, %s49
      %s38 = sphi 0, %s45
      %s39 = sphi 0, %s37
      %s40 = sphi 0, %s38
      %s41 = sphi 0, %s39
      %s42 = sphi 0, %s40
      %s54 = sphi 0, %s56
      %s57 = sphi 0, %s54
      %s58 = sphi 0, %s57
      %s74 = sphi 0, %s58
      %s82 = sphi 0, %s84
      %s85 = sphi 0, %s82
      %s86 = sphi 0, %s85
      %s102 = sphi 0, %s86
      %s106 = sphi 0, %s106
      %s108 = sphi 0, %s106
      %s109 = sphi 0, %s108
      %s123 = sphi 0, %s109
      %s127 = sphi 0, %s127
      %s129 = sphi 0, %s127
      %s130 = sphi 0, %s129
      %s144 = sphi 0, %s130
      %s148 = sphi 0, %s148
      %s150 = sphi 0, %s148
      %s151 = sphi 0, %s150
      %s165 = sphi 0, %s151
      %s169 = sphi 0, %s169
      %s171 = sphi 0, %s169
      %s172 = sphi 0, %s171
      %s186 = sphi 0, %s172
      %s190 = sphi 0, %s190
      %s192 = sphi 0, %s190
      %s193 = sphi 0, %s192
      %s207 = sphi 0, %s193
      %s211 = sphi 0, %s211
      %s213 = sphi 0, %s211
      %s214 = sphi 0, %s213
      %s228 = sphi 0, %s214
      %s232 = sphi 0, %s232
      %s234 = sphi 0, %s232
      %s235 = sphi 0, %s234
      %s249 = sphi 0, %s235
      %s253 = sphi 0, %s253
      %s255 = sphi 0, %s253
      %s256 = sphi 0, %s255
      %s270 = sphi 0, %s256
      %s274 = sphi 0, %s274
      %s276 = sphi 0, %s274
      %s277 = sphi 0, %s276
      %s291 = sphi 0, %s277
      %s295 = sphi 0, %s295
      %s297 = sphi 0, %s295
      %s298 = sphi 0, %s297
      %s312 = sphi 0, %s298
      %s320 = sphi 0, %s322
      %s323 = sphi 0, %s320
      %s324 = sphi 0, %s323
      %s340 = sphi 0, %s324
    $region4: #{tpu_custom_call.1} parent=1 // loop_header_branch
      %33 = sbr.rel (%p31) target = $region8
    $region5: #{tpu_custom_call.1} parent=1 // loop_body
      %s35 = ssub.s32 %s30, 1
      %s36 = ssub.s32 %s30, 2
      %s43 = sadd.s32 1, %s38
      %p44 = scmp.ge.s32.totalorder %s43, 1
      %s45 = scalar_select %p44, 0, %s43
      %s46 = sadd.s32 1, %s37
      %s47 = scalar_select %p44, %s46, %s37
      %p48 = scmp.ge.s32.totalorder %s47, 2
      %s49 = scalar_select %p48, 0, %s47
      %s50 = ssub.s32 %s37, %s49
      %s51 = ssub.s32 %s38, %s45
      %s52 = sor.u32 %s50, %s51
      %p53 = scmp.eq.s32.totalorder %s52, 0
      %s55 = sadd.s32 %s54, 1
      %s56 = scalar_select %p53, %s54, %s55
      %p59 = pneg %p53
      %p60 = scmp.eq.s32.totalorder %s30, 1
      %p61 = por %p59, %p60
      %p62 = scmp.ne.s32.totalorder %s54, %s57
      %p63 = scmp.eq.s32.totalorder %s30, 0
      %p64 = por %p62, %p63
      %p65 = scmp.ne.s32.totalorder %s54, %s57
      %p66 = scmp.eq.s32.totalorder %s35, 1
      %p67 = por %p65, %p66
      %p68 = scmp.ne.s32.totalorder %s57, %s58
      %p69 = scmp.eq.s32.totalorder %s35, 0
      %p70 = por %p68, %p69
      %p71 = scmp.ne.s32.totalorder %s57, %s58
      %p72 = scmp.eq.s32.totalorder %s36, 1
      %p73 = por %p71, %p72
      %p75 = scmp.ne.s32.totalorder %s58, %s74
      %p76 = scmp.eq.s32.totalorder %s36, 0
      %p77 = por %p75, %p76
      %s78 = ssub.s32 %s37, %s49
      %s79 = ssub.s32 %s38, %s45
      %s80 = sor.u32 %s78, %s79
      %p81 = scmp.eq.s32.totalorder %s80, 0
      %s83 = sadd.s32 %s82, 1
      %s84 = scalar_select %p81, %s82, %s83
      %p87 = pneg %p81
      %p88 = scmp.eq.s32.totalorder %s30, 1
      %p89 = por %p87, %p88
      %p90 = scmp.ne.s32.totalorder %s82, %s85
      %p91 = scmp.eq.s32.totalorder %s30, 0
      %p92 = por %p90, %p91
      %p93 = scmp.ne.s32.totalorder %s82, %s85
      %p94 = scmp.eq.s32.totalorder %s35, 1
      %p95 = por %p93, %p94
      %p96 = scmp.ne.s32.totalorder %s85, %s86
      %p97 = scmp.eq.s32.totalorder %s35, 0
      %p98 = por %p96, %p97
      %p99 = scmp.ne.s32.totalorder %s85, %s86
      %p100 = scmp.eq.s32.totalorder %s36, 1
      %p101 = por %p99, %p100
      %p103 = scmp.ne.s32.totalorder %s86, %s102
      %p104 = scmp.eq.s32.totalorder %s36, 0
      %p105 = por %p103, %p104
      %s107 = sadd.s32 %s106, 1
      %p110 = scmp.eq.s32.totalorder %s30, 1
      %p111 = scmp.ne.s32.totalorder %s106, %s108
      %p112 = scmp.eq.s32.totalorder %s30, 0
      %p113 = por %p111, %p112
      %p114 = scmp.ne.s32.totalorder %s106, %s108
      %p115 = scmp.eq.s32.totalorder %s35, 1
      %p116 = por %p114, %p115
      %p117 = scmp.ne.s32.totalorder %s108, %s109
      %p118 = scmp.eq.s32.totalorder %s35, 0
      %p119 = por %p117, %p118
      %p120 = scmp.ne.s32.totalorder %s108, %s109
      %p121 = scmp.eq.s32.totalorder %s36, 1
      %p122 = por %p120, %p121
      %p124 = scmp.ne.s32.totalorder %s109, %s123
      %p125 = scmp.eq.s32.totalorder %s36, 0
      %p126 = por %p124, %p125
      %s128 = sadd.s32 %s127, 1
      %p131 = scmp.eq.s32.totalorder %s30, 1
      %p132 = scmp.ne.s32.totalorder %s127, %s129
      %p133 = scmp.eq.s32.totalorder %s30, 0
      %p134 = por %p132, %p133
      %p135 = scmp.ne.s32.totalorder %s127, %s129
      %p136 = scmp.eq.s32.totalorder %s35, 1
      %p137 = por %p135, %p136
      %p138 = scmp.ne.s32.totalorder %s129, %s130
      %p139 = scmp.eq.s32.totalorder %s35, 0
      %p140 = por %p138, %p139
      %p141 = scmp.ne.s32.totalorder %s129, %s130
      %p142 = scmp.eq.s32.totalorder %s36, 1
      %p143 = por %p141, %p142
      %p145 = scmp.ne.s32.totalorder %s130, %s144
      %p146 = scmp.eq.s32.totalorder %s36, 0
      %p147 = por %p145, %p146
      %s149 = sadd.s32 %s148, 1
      %p152 = scmp.eq.s32.totalorder %s30, 1
      %p153 = scmp.ne.s32.totalorder %s148, %s150
      %p154 = scmp.eq.s32.totalorder %s30, 0
      %p155 = por %p153, %p154
      %p156 = scmp.ne.s32.totalorder %s148, %s150
      %p157 = scmp.eq.s32.totalorder %s35, 1
      %p158 = por %p156, %p157
      %p159 = scmp.ne.s32.totalorder %s150, %s151
      %p160 = scmp.eq.s32.totalorder %s35, 0
      %p161 = por %p159, %p160
      %p162 = scmp.ne.s32.totalorder %s150, %s151
      %p163 = scmp.eq.s32.totalorder %s36, 1
      %p164 = por %p162, %p163
      %p166 = scmp.ne.s32.totalorder %s151, %s165
      %p167 = scmp.eq.s32.totalorder %s36, 0
      %p168 = por %p166, %p167
      %s170 = sadd.s32 %s169, 1
      %p173 = scmp.eq.s32.totalorder %s30, 1
      %p174 = scmp.ne.s32.totalorder %s169, %s171
      %p175 = scmp.eq.s32.totalorder %s30, 0
      %p176 = por %p174, %p175
      %p177 = scmp.ne.s32.totalorder %s169, %s171
      %p178 = scmp.eq.s32.totalorder %s35, 1
      %p179 = por %p177, %p178
      %p180 = scmp.ne.s32.totalorder %s171, %s172
      %p181 = scmp.eq.s32.totalorder %s35, 0
      %p182 = por %p180, %p181
      %p183 = scmp.ne.s32.totalorder %s171, %s172
      %p184 = scmp.eq.s32.totalorder %s36, 1
      %p185 = por %p183, %p184
      %p187 = scmp.ne.s32.totalorder %s172, %s186
      %p188 = scmp.eq.s32.totalorder %s36, 0
      %p189 = por %p187, %p188
      %s191 = sadd.s32 %s190, 1
      %p194 = scmp.eq.s32.totalorder %s30, 1
      %p195 = scmp.ne.s32.totalorder %s190, %s192
      %p196 = scmp.eq.s32.totalorder %s30, 0
      %p197 = por %p195, %p196
      %p198 = scmp.ne.s32.totalorder %s190, %s192
      %p199 = scmp.eq.s32.totalorder %s35, 1
      %p200 = por %p198, %p199
      %p201 = scmp.ne.s32.totalorder %s192, %s193
      %p202 = scmp.eq.s32.totalorder %s35, 0
      %p203 = por %p201, %p202
      %p204 = scmp.ne.s32.totalorder %s192, %s193
      %p205 = scmp.eq.s32.totalorder %s36, 1
      %p206 = por %p204, %p205
      %p208 = scmp.ne.s32.totalorder %s193, %s207
      %p209 = scmp.eq.s32.totalorder %s36, 0
      %p210 = por %p208, %p209
      %s212 = sadd.s32 %s211, 1
      %p215 = scmp.eq.s32.totalorder %s30, 1
      %p216 = scmp.ne.s32.totalorder %s211, %s213
      %p217 = scmp.eq.s32.totalorder %s30, 0
      %p218 = por %p216, %p217
      %p219 = scmp.ne.s32.totalorder %s211, %s213
      %p220 = scmp.eq.s32.totalorder %s35, 1
      %p221 = por %p219, %p220
      %p222 = scmp.ne.s32.totalorder %s213, %s214
      %p223 = scmp.eq.s32.totalorder %s35, 0
      %p224 = por %p222, %p223
      %p225 = scmp.ne.s32.totalorder %s213, %s214
      %p226 = scmp.eq.s32.totalorder %s36, 1
      %p227 = por %p225, %p226
      %p229 = scmp.ne.s32.totalorder %s214, %s228
      %p230 = scmp.eq.s32.totalorder %s36, 0
      %p231 = por %p229, %p230
      %s233 = sadd.s32 %s232, 1
      %p236 = scmp.eq.s32.totalorder %s30, 1
      %p237 = scmp.ne.s32.totalorder %s232, %s234
      %p238 = scmp.eq.s32.totalorder %s30, 0
      %p239 = por %p237, %p238
      %p240 = scmp.ne.s32.totalorder %s232, %s234
      %p241 = scmp.eq.s32.totalorder %s35, 1
      %p242 = por %p240, %p241
      %p243 = scmp.ne.s32.totalorder %s234, %s235
      %p244 = scmp.eq.s32.totalorder %s35, 0
      %p245 = por %p243, %p244
      %p246 = scmp.ne.s32.totalorder %s234, %s235
      %p247 = scmp.eq.s32.totalorder %s36, 1
      %p248 = por %p246, %p247
      %p250 = scmp.ne.s32.totalorder %s235, %s249
      %p251 = scmp.eq.s32.totalorder %s36, 0
      %p252 = por %p250, %p251
      %s254 = sadd.s32 %s253, 1
      %p257 = scmp.eq.s32.totalorder %s30, 1
      %p258 = scmp.ne.s32.totalorder %s253, %s255
      %p259 = scmp.eq.s32.totalorder %s30, 0
      %p260 = por %p258, %p259
      %p261 = scmp.ne.s32.totalorder %s253, %s255
      %p262 = scmp.eq.s32.totalorder %s35, 1
      %p263 = por %p261, %p262
      %p264 = scmp.ne.s32.totalorder %s255, %s256
      %p265 = scmp.eq.s32.totalorder %s35, 0
      %p266 = por %p264, %p265
      %p267 = scmp.ne.s32.totalorder %s255, %s256
      %p268 = scmp.eq.s32.totalorder %s36, 1
      %p269 = por %p267, %p268
      %p271 = scmp.ne.s32.totalorder %s256, %s270
      %p272 = scmp.eq.s32.totalorder %s36, 0
      %p273 = por %p271, %p272
      %s275 = sadd.s32 %s274, 1
      %p278 = scmp.eq.s32.totalorder %s30, 1
      %p279 = scmp.ne.s32.totalorder %s274, %s276
      %p280 = scmp.eq.s32.totalorder %s30, 0
      %p281 = por %p279, %p280
      %p282 = scmp.ne.s32.totalorder %s274, %s276
      %p283 = scmp.eq.s32.totalorder %s35, 1
      %p284 = por %p282, %p283
      %p285 = scmp.ne.s32.totalorder %s276, %s277
      %p286 = scmp.eq.s32.totalorder %s35, 0
      %p287 = por %p285, %p286
      %p288 = scmp.ne.s32.totalorder %s276, %s277
      %p289 = scmp.eq.s32.totalorder %s36, 1
      %p290 = por %p288, %p289
      %p292 = scmp.ne.s32.totalorder %s277, %s291
      %p293 = scmp.eq.s32.totalorder %s36, 0
      %p294 = por %p292, %p293
      %s296 = sadd.s32 %s295, 1
      %p299 = scmp.eq.s32.totalorder %s30, 1
      %p300 = scmp.ne.s32.totalorder %s295, %s297
      %p301 = scmp.eq.s32.totalorder %s30, 0
      %p302 = por %p300, %p301
      %p303 = scmp.ne.s32.totalorder %s295, %s297
      %p304 = scmp.eq.s32.totalorder %s35, 1
      %p305 = por %p303, %p304
      %p306 = scmp.ne.s32.totalorder %s297, %s298
      %p307 = scmp.eq.s32.totalorder %s35, 0
      %p308 = por %p306, %p307
      %p309 = scmp.ne.s32.totalorder %s297, %s298
      %p310 = scmp.eq.s32.totalorder %s36, 1
      %p311 = por %p309, %p310
      %p313 = scmp.ne.s32.totalorder %s298, %s312
      %p314 = scmp.eq.s32.totalorder %s36, 0
      %p315 = por %p313, %p314
      %s316 = ssub.s32 %s37, %s49
      %s317 = ssub.s32 %s38, %s45
      %s318 = sor.u32 %s316, %s317
      %p319 = scmp.eq.s32.totalorder %s318, 0
      %s321 = sadd.s32 %s320, 1
      %s322 = scalar_select %p319, %s320, %s321
      %p325 = pneg %p319
      %p326 = scmp.eq.s32.totalorder %s30, 1
      %p327 = por %p325, %p326
      %p328 = scmp.ne.s32.totalorder %s320, %s323
      %p329 = scmp.eq.s32.totalorder %s30, 0
      %p330 = por %p328, %p329
      %p331 = scmp.ne.s32.totalorder %s320, %s323
      %p332 = scmp.eq.s32.totalorder %s35, 1
      %p333 = por %p331, %p332
      %p334 = scmp.ne.s32.totalorder %s323, %s324
      %p335 = scmp.eq.s32.totalorder %s35, 0
      %p336 = por %p334, %p335
      %p337 = scmp.ne.s32.totalorder %s323, %s324
      %p338 = scmp.eq.s32.totalorder %s36, 1
      %p339 = por %p337, %p338
      %p341 = scmp.ne.s32.totalorder %s324, %s340
      %p342 = scmp.eq.s32.totalorder %s36, 0
      %p343 = por %p341, %p342
      %p344 = scmp.le.s32.totalorder 1, %s30
      %p345 = scmp.lt.s32.totalorder %s30, 3
      %p346 = pnand %p344, %p345
      %p347 = pneg %p346
      // Predicated region
      $region9: #{tpu_custom_call.1} parent=5 // pred_check
        _
      $region10: #{tpu_custom_call.1} parent=5 // pred_check_branch
        %349 = sbr.rel (%p346) target = $region12
      $region11: #{tpu_custom_call.1} parent=5 // pred_region
        %s350 = ssub.s32 %s30, 1
        // Predicated region
        $region13: #{tpu_custom_call.1} parent=11 // pred_check
          %p351 = pneg %p119
        $region14: #{tpu_custom_call.1} parent=11 // pred_check_branch
          %353 = sbr.rel (%p351) target = $region16
        $region15: #{tpu_custom_call.1} parent=11 // pred_region
          %s355 = ssub.s32 256, 256
          %356 = vsyncadd [#allocation6], %s355
          %s357 = sshll.u32 [#allocation7], 4
          %s358 = int_to_ptr.vmem [resolvable:$true] %s357
          %363 = dma.hbm_to_vmem [thread:$0]  %s2, 256, %s358, [#allocation6], 64, 64, 4
        $region16: #{tpu_custom_call.1} parent=11 // pred_fallthru
          _
        // Predicated region
        $region17: #{tpu_custom_call.1} parent=11 // pred_check
          %p364 = pneg %p140
        $region18: #{tpu_custom_call.1} parent=11 // pred_check_branch
          %366 = sbr.rel (%p364) target = $region20
        $region19: #{tpu_custom_call.1} parent=11 // pred_region
          _
        $region20: #{tpu_custom_call.1} parent=11 // pred_fallthru
          _
        // Predicated region
        $region21: #{tpu_custom_call.1} parent=11 // pred_check
          %p367 = pneg %p161
        $region22: #{tpu_custom_call.1} parent=11 // pred_check_branch
          %369 = sbr.rel (%p367) target = $region24
        $region23: #{tpu_custom_call.1} parent=11 // pred_region
          _
        $region24: #{tpu_custom_call.1} parent=11 // pred_fallthru
          _
        // Predicated region
        $region25: #{tpu_custom_call.1} parent=11 // pred_check
          %p370 = pneg %p182
        $region26: #{tpu_custom_call.1} parent=11 // pred_check_branch
          %372 = sbr.rel (%p370) target = $region28
        $region27: #{tpu_custom_call.1} parent=11 // pred_region
          %s374 = ssub.s32 16, 16
          %375 = vsyncadd [#allocation9], %s374
          %s377 = sshll.u32 [#allocation8], 4
          %s378 = int_to_ptr.vmem [resolvable:$true] %s377
          %380 = dma.hbm_to_vmem [thread:$0]  %s5, 16, %s378, [#allocation9]
        $region28: #{tpu_custom_call.1} parent=11 // pred_fallthru
          _
        // Predicated region
        $region29: #{tpu_custom_call.1} parent=11 // pred_check
          %p381 = pneg %p203
        $region30: #{tpu_custom_call.1} parent=11 // pred_check_branch
          %383 = sbr.rel (%p381) target = $region32
        $region31: #{tpu_custom_call.1} parent=11 // pred_region
          %s385 = ssub.s32 64, 64
          %386 = vsyncadd [#allocation9], %s385
          %s388 = sshll.u32 [#allocation10], 4
          %s389 = int_to_ptr.vmem [resolvable:$true] %s388
          %391 = dma.hbm_to_vmem [thread:$0]  %s6, 64, %s389, [#allocation9]
        $region32: #{tpu_custom_call.1} parent=11 // pred_fallthru
          _
        // Predicated region
        $region33: #{tpu_custom_call.1} parent=11 // pred_check
          %p392 = pneg %p224
        $region34: #{tpu_custom_call.1} parent=11 // pred_check_branch
          %394 = sbr.rel (%p392) target = $region36
        $region35: #{tpu_custom_call.1} parent=11 // pred_region
          %s396 = ssub.s32 16, 16
          %397 = vsyncadd [#allocation12], %s396
          %s399 = sshll.u32 [#allocation11], 4
          %s400 = int_to_ptr.vmem [resolvable:$true] %s399
          %402 = dma.hbm_to_vmem [thread:$0]  %s7, 16, %s400, [#allocation12]
        $region36: #{tpu_custom_call.1} parent=11 // pred_fallthru
          _
        // Predicated region
        $region37: #{tpu_custom_call.1} parent=11 // pred_check
          %p403 = pneg %p245
        $region38: #{tpu_custom_call.1} parent=11 // pred_check_branch
          %405 = sbr.rel (%p403) target = $region40
        $region39: #{tpu_custom_call.1} parent=11 // pred_region
          %s407 = ssub.s32 256, 256
          %408 = vsyncadd [#allocation12], %s407
          %s409 = sshll.u32 [#allocation13], 4
          %s410 = int_to_ptr.vmem [resolvable:$true] %s409
          %415 = dma.hbm_to_vmem [thread:$0]  %s8, 256, %s410, [#allocation12], 64, 64, 4
        $region40: #{tpu_custom_call.1} parent=11 // pred_fallthru
          _
        // Predicated region
        $region41: #{tpu_custom_call.1} parent=11 // pred_check
          %p416 = pneg %p266
        $region42: #{tpu_custom_call.1} parent=11 // pred_check_branch
          %418 = sbr.rel (%p416) target = $region44
        $region43: #{tpu_custom_call.1} parent=11 // pred_region
          %s420 = ssub.s32 16, 16
          %421 = vsyncadd [#allocation15], %s420
          %s423 = sshll.u32 [#allocation14], 4
          %s424 = int_to_ptr.vmem [resolvable:$true] %s423
          %426 = dma.hbm_to_vmem [thread:$0]  %s9, 16, %s424, [#allocation15]
        $region44: #{tpu_custom_call.1} parent=11 // pred_fallthru
          _
        // Predicated region
        $region45: #{tpu_custom_call.1} parent=11 // pred_check
          %p427 = pneg %p287
        $region46: #{tpu_custom_call.1} parent=11 // pred_check_branch
          %429 = sbr.rel (%p427) target = $region48
        $region47: #{tpu_custom_call.1} parent=11 // pred_region
          _
        $region48: #{tpu_custom_call.1} parent=11 // pred_fallthru
          _
        // Predicated region
        $region49: #{tpu_custom_call.1} parent=11 // pred_check
          %p430 = pneg %p308
        $region50: #{tpu_custom_call.1} parent=11 // pred_check_branch
          %432 = sbr.rel (%p430) target = $region52
        $region51: #{tpu_custom_call.1} parent=11 // pred_region
          _
        $region52: #{tpu_custom_call.1} parent=11 // pred_fallthru
          _
      $region12: #{tpu_custom_call.1} parent=5 // pred_fallthru
        _
      %p433 = scmp.lt.s32.totalorder %s30, 2
      // Predicated region
      $region53: #{tpu_custom_call.1} parent=5 // pred_check
        %p434 = pneg %p433
      $region54: #{tpu_custom_call.1} parent=5 // pred_check_branch
        %436 = sbr.rel (%p434) target = $region56
      $region55: #{tpu_custom_call.1} parent=5 // pred_region
        // Predicated region
        $region57: #{tpu_custom_call.1} parent=55 // pred_check
          %p437 = pneg %p64
        $region58: #{tpu_custom_call.1} parent=55 // pred_check_branch
          %439 = sbr.rel (%p437) target = $region60
        $region59: #{tpu_custom_call.1} parent=55 // pred_region
          %s440 = sand.u32 %s54, 1
          %s441 = scalar_lea.sflag [#allocation3], %s440
          %s442 = sand.u32 %s54, 1
          %s443 = smul.addr %s442, 4
          %s444 = scalar_lea.vmem [#allocation2], %s443
          %s446 = ssub.s32 64, 64
          %447 = vsyncadd %s441, %s446
          %s448 = sadd.s32 %s38, %s37
          %s449 = smul.addr %s448, 64
          %s450 = scalar_lea.hbm %s0, %s449
          %s452 = sshll.u32 %s444, 4
          %s453 = int_to_ptr.vmem [resolvable:$true] %s452
          %455 = dma.hbm_to_vmem [thread:$0]  %s450, 64, %s453, %s441
        $region60: #{tpu_custom_call.1} parent=55 // pred_fallthru
          _
        // Predicated region
        $region61: #{tpu_custom_call.1} parent=55 // pred_check
          %p456 = pneg %p92
        $region62: #{tpu_custom_call.1} parent=55 // pred_check_branch
          %458 = sbr.rel (%p456) target = $region64
        $region63: #{tpu_custom_call.1} parent=55 // pred_region
          %s459 = sand.u32 %s30, 1
          %s460 = scalar_lea.sflag [#allocation6], %s459
          %s461 = sand.u32 %s82, 1
          %s462 = smul.addr %s461, 8
          %s463 = scalar_lea.vmem [#allocation5], %s462
          %s465 = ssub.s32 128, 128
          %466 = vsyncadd %s460, %s465
          %s467 = smul.addr %s38, 2
          %s468 = smul.addr %s37, 2
          %s469 = sadd.s32 %s467, %s468
          %s470 = smul.addr %s469, 64
          %s471 = scalar_lea.hbm %s1, %s470
          %s472 = sshll.u32 %s463, 4
          %s473 = int_to_ptr.vmem [resolvable:$true] %s472
          %478 = dma.hbm_to_vmem [thread:$0]  %s471, 128, %s473, %s460, 64, 64, 4
        $region64: #{tpu_custom_call.1} parent=55 // pred_fallthru
          _
      $region56: #{tpu_custom_call.1} parent=5 // pred_fallthru
        _
      %p479 = scmp.le.s32.totalorder 1, %s30
      %p480 = scmp.lt.s32.totalorder %s30, 3
      %p481 = pnand %p479, %p480
      %p482 = pneg %p481
      // Predicated region
      $region65: #{tpu_custom_call.1} parent=5 // pred_check
        _
      $region66: #{tpu_custom_call.1} parent=5 // pred_check_branch
        %484 = sbr.rel (%p481) target = $region68
      $region67: #{tpu_custom_call.1} parent=5 // pred_region
        %s485 = ssub.s32 %s30, 1
        %s486 = sand.u32 %s57, 1
        %s487 = scalar_lea.sflag [#allocation3], %s486
        %s488 = sand.u32 %s57, 1
        %s489 = smul.addr %s488, 4
        %s490 = scalar_lea.vmem [#allocation2], %s489
        // Predicated region
        $region69: #{tpu_custom_call.1} parent=67 // pred_check
          %p491 = pneg %p70
        $region70: #{tpu_custom_call.1} parent=67 // pred_check_branch
          %493 = sbr.rel (%p491) target = $region72
        $region71: #{tpu_custom_call.1} parent=67 // pred_region
          %494 = dma.done %s487, 64
        $region72: #{tpu_custom_call.1} parent=67 // pred_fallthru
          _
        %s495 = sand.u32 %s35, 1
        %s496 = scalar_lea.sflag [#allocation6], %s495
        %s497 = sand.u32 %s85, 1
        %s498 = smul.addr %s497, 8
        %s499 = scalar_lea.vmem [#allocation5], %s498
        // Predicated region
        $region73: #{tpu_custom_call.1} parent=67 // pred_check
          %p500 = pneg %p98
        $region74: #{tpu_custom_call.1} parent=67 // pred_check_branch
          %502 = sbr.rel (%p500) target = $region76
        $region75: #{tpu_custom_call.1} parent=67 // pred_region
          %503 = dma.done %s496, 128
        $region76: #{tpu_custom_call.1} parent=67 // pred_fallthru
          _
        // Predicated region
        $region77: #{tpu_custom_call.1} parent=67 // pred_check
          %p504 = pneg %p119
        $region78: #{tpu_custom_call.1} parent=67 // pred_check_branch
          %506 = sbr.rel (%p504) target = $region80
        $region79: #{tpu_custom_call.1} parent=67 // pred_region
          %507 = dma.done [#allocation6], 256
        $region80: #{tpu_custom_call.1} parent=67 // pred_fallthru
          _
        // Predicated region
        $region81: #{tpu_custom_call.1} parent=67 // pred_check
          %p508 = pneg %p182
        $region82: #{tpu_custom_call.1} parent=67 // pred_check_branch
          %510 = sbr.rel (%p508) target = $region84
        $region83: #{tpu_custom_call.1} parent=67 // pred_region
          %511 = dma.done [#allocation9], 16
        $region84: #{tpu_custom_call.1} parent=67 // pred_fallthru
          _
        // Predicated region
        $region85: #{tpu_custom_call.1} parent=67 // pred_check
          %p512 = pneg %p203
        $region86: #{tpu_custom_call.1} parent=67 // pred_check_branch
          %514 = sbr.rel (%p512) target = $region88
        $region87: #{tpu_custom_call.1} parent=67 // pred_region
          %515 = dma.done [#allocation9], 64
        $region88: #{tpu_custom_call.1} parent=67 // pred_fallthru
          _
        // Predicated region
        $region89: #{tpu_custom_call.1} parent=67 // pred_check
          %p516 = pneg %p224
        $region90: #{tpu_custom_call.1} parent=67 // pred_check_branch
          %518 = sbr.rel (%p516) target = $region92
        $region91: #{tpu_custom_call.1} parent=67 // pred_region
          %519 = dma.done [#allocation12], 16
        $region92: #{tpu_custom_call.1} parent=67 // pred_fallthru
          _
        // Predicated region
        $region93: #{tpu_custom_call.1} parent=67 // pred_check
          %p520 = pneg %p245
        $region94: #{tpu_custom_call.1} parent=67 // pred_check_branch
          %522 = sbr.rel (%p520) target = $region96
        $region95: #{tpu_custom_call.1} parent=67 // pred_region
          %523 = dma.done [#allocation12], 256
        $region96: #{tpu_custom_call.1} parent=67 // pred_fallthru
          _
        // Predicated region
        $region97: #{tpu_custom_call.1} parent=67 // pred_check
          %p524 = pneg %p266
        $region98: #{tpu_custom_call.1} parent=67 // pred_check_branch
          %526 = sbr.rel (%p524) target = $region100
        $region99: #{tpu_custom_call.1} parent=67 // pred_region
          %527 = dma.done [#allocation15], 16
        $region100: #{tpu_custom_call.1} parent=67 // pred_fallthru
          _
        %s528 = sand.u32 %s57, 1
        %s529 = scalar_lea.sflag [#allocation3], %s528
        %s530 = sand.u32 %s57, 1
        %s531 = smul.addr %s530, 4
        %s532 = scalar_lea.vmem [#allocation2], %s531
        %p533 = pneg %p70
        %p534 = pneg %p67
        %s535 = sand.u32 %s35, 1
        %s536 = scalar_lea.sflag [#allocation6], %s535
        %s537 = sand.u32 %s85, 1
        %s538 = smul.addr %s537, 8
        %s539 = scalar_lea.vmem [#allocation5], %s538
        %p540 = pneg %p98
        %p541 = pneg %p95
        %p542 = pneg %p119
        %p543 = pneg %p116
        %p544 = pneg %p140
        %p545 = pneg %p137
        %p546 = pneg %p161
        %p547 = pneg %p158
        %p548 = pneg %p182
        %p549 = pneg %p179
        %p550 = pneg %p203
        %p551 = pneg %p200
        %p552 = pneg %p224
        %p553 = pneg %p221
        %p554 = pneg %p245
        %p555 = pneg %p242
        %p556 = pneg %p266
        %p557 = pneg %p263
        %p558 = pneg %p287
        %p559 = pneg %p284
        %p560 = pneg %p308
        %p561 = pneg %p305
        %p562 = pneg %p336
        %p563 = pneg %p333
        %s564 = sand.u32 %s323, 1
        %s565 = scalar_lea.sflag [#allocation4], %s564
        %s566 = sand.u32 %s323, 1
        %s567 = smul.addr %s566, 8
        %s568 = scalar_lea.vmem [#allocation16], %s567
        %s570 = smul.u32 %s40, 8
        %v571 = vld [vmem:[%s490] sm:$0xf]
        %v572 = vld [vmem:[#allocation7] sm:$0xf]
        %v573 = vld [vmem:[#allocation7 + $0x4] sm:$0xf]
        %v574 = vld [vmem:[#allocation7 + $0x8] sm:$0xf]
        %v575 = vld [vmem:[#allocation7 + $0xc] sm:$0xf]
        %v576 = vld [vmem:[%s3] sm:$0x1]
        %v578 = vlaneseq
        %v579 = vshrl.u32 %v578, 7
        %v580 = vsub.s32 0, %v579
        %v581 = vrot.slane %v576, %v580
        %v587 = vunpack.c.l.b16 %v572
        %v588 = vunpack.c.l.b16 %v573
        %v589 = vunpack.c.l.b16 %v574
        %v590 = vunpack.c.l.b16 %v575
        %v591 = vpack.c.b16 %v588, %v587
        %v592 = vpack.c.b16 %v590, %v589
        %vm595 = vcmask 261120
        %v597 = vsel %vm595, %v571, 0
        %599 = vmatprep.subr.bf16.mxu0 0
        %600 = vmatpush1.bf16.msra.mxu0 0
        %601 = vmatprep.subr.bf16.mxu0 0
        %602 = vmatpush1.bf16.msra.mxu0 0
        %603 = vmatprep.subr.bf16.mxu0 0
        %604 = vmatpush1.bf16.msra.mxu0 0
        %605 = vmatprep.subr.bf16.mxu0 0
        %606 = vmatpush1.bf16.msra.mxu0 0
        %607 = vmatprep.subr.bf16.mxu0 0
        %608 = vmatpush1.bf16.msra.mxu0 0
        %609 = vmatprep.subr.bf16.mxu0 0
        %610 = vmatpush1.bf16.msra.mxu0 0
        %611 = vmatprep.subr.bf16.mxu0 0
        %612 = vmatpush1.bf16.msra.mxu0 %v592
        %613 = vmatprep.subr.bf16.mxu0 0
        %614 = vmatpush1.bf16.msra.mxu0 %v591
        %615 = vmatprep.subr.bf16.mxu0 0
        %616 = vmatpush2.bf16.msra.mxu0 0
        %617 = vmatprep.subr.bf16.mxu0 0
        %618 = vmatpush2.bf16.msra.mxu0 0
        %619 = vmatprep.subr.bf16.mxu0 0
        %620 = vmatpush2.bf16.msra.mxu0 0
        %621 = vmatprep.subr.bf16.mxu0 0
        %622 = vmatpush2.bf16.msra.mxu0 0
        %623 = vmatprep.subr.bf16.mxu0 0
        %624 = vmatpush2.bf16.msra.mxu0 0
        %625 = vmatprep.subr.bf16.mxu0 0
        %626 = vmatpush2.bf16.msra.mxu0 0
        %627 = vmatprep.subr.bf16.mxu0 0
        %628 = vmatpush2.bf16.msra.mxu0 0
        %629 = vmatprep.subr.bf16.mxu0 0
        %630 = vmatpush2.bf16.msra.mxu0 0
        %631 = vmatprep.mubr.bf16.mxu0 0
        %632 = vmatmul.mubr.bf16.gmra.mxu0 %v597
        %v633 = vpop.f32.mrf.mxu0
        %v634 = vadd.f32 %v581, %v633
        %v635 = vpop.f32.mrf.mxu0
        %v636 = vpop.f32.mrf.mxu0
        %v637 = vpop.f32.mrf.mxu0
        %638 = vdwg.mxu0
        %v639 = vmul.f32 %v634, %v634
        %v640 = vmul.f32 %v634, %v639
        %v641 = vmul.f32 %v640, 0.044715
        %v642 = vadd.f32 %v634, %v641
        %v643 = vmul.f32 %v642, 0.7978846
        %v644 = vtanh.pop %v643
        %v645 = vadd.f32 %v644, 1.0
        %v646 = vmul.f32 %v645, 0.5
        %v647 = vmul.f32 %v634, %v646
        %649 = vrot.lane.b32.xlu0 %v647, 96
        %v650 = vpop.permute.xlu0 %649
        %v652 = vsel %vm595, %v650, 0.0
        %653 = vadd.xlane.f32.xlu0 %v652
        %v654 = vpop.xlane.xlu0 %653
        %v655 = vrcp.pop 32.0
        %v656 = vmul.f32 %v654, %v655
        %v657 = vsub.f32 %v647, %v656
        %v658 = vmul.f32 %v657, %v657
        %660 = vrot.lane.b32.xlu0 %v658, 96
        %v661 = vpop.permute.xlu0 %660
        %v663 = vsel %vm595, %v661, 0.0
        %664 = vadd.xlane.f32.xlu0 %v663
        %v665 = vpop.xlane.xlu0 %664
        %v666 = vmul.f32 %v665, %v655
        %v667 = vadd.f32 %v666, 1e-05
        %v668 = vrsqrt.pop %v667
        %v669 = vmul.f32 %v657, %v668
        %v670 = vld [vmem:[%s4] sm:$0x1]
        %v672 = vlaneseq
        %v673 = vshrl.u32 %v672, 7
        %v674 = vsub.s32 0, %v673
        %v675 = vrot.slane %v670, %v674
        %676 = vrot.lane.b32.xlu0 %v675, 32
        %v677 = vpop.permute.xlu0 %676
        %v679 = vmul.f32 %v669, %v677
        %v680 = vld [vmem:[#allocation8] sm:$0x1]
        %v682 = vlaneseq
        %v683 = vshrl.u32 %v682, 7
        %v684 = vsub.s32 0, %v683
        %v685 = vrot.slane %v680, %v684
        %686 = vrot.lane.b32.xlu0 %v685, 32
        %v687 = vpop.permute.xlu0 %686
        %v689 = vadd.f32 %v679, %v687
        %v690 = vld [vmem:[%s499] sm:$0xf]
        %v691 = vld [vmem:[%s499 + $0x4] sm:$0xf]
        %v694 = vunpack.c.l.b16 %v690
        %v695 = vunpack.c.l.b16 %v691
        %v696 = vpack.c.b16 %v695, %v694
        %v698 = vsel %vm595, %v696, 0
        %700 = vmatprep.subr.bf16.mxu0 0
        %701 = vmatpush1.bf16.msra.mxu0 0
        %702 = vmatprep.subr.bf16.mxu0 0
        %703 = vmatpush1.bf16.msra.mxu0 0
        %704 = vmatprep.subr.bf16.mxu0 0
        %705 = vmatpush1.bf16.msra.mxu0 0
        %706 = vmatprep.subr.bf16.mxu0 0
        %707 = vmatpush1.bf16.msra.mxu0 0
        %708 = vmatprep.subr.bf16.mxu0 0
        %709 = vmatpush1.bf16.msra.mxu0 0
        %710 = vmatprep.subr.bf16.mxu0 0
        %711 = vmatpush1.bf16.msra.mxu0 0
        %712 = vmatprep.subr.bf16.mxu0 0
        %713 = vmatpush1.bf16.msra.mxu0 %v592
        %714 = vmatprep.subr.bf16.mxu0 0
        %715 = vmatpush1.bf16.msra.mxu0 %v591
        %716 = vmatprep.subr.bf16.mxu0 0
        %717 = vmatpush2.bf16.msra.mxu0 0
        %718 = vmatprep.subr.bf16.mxu0 0
        %719 = vmatpush2.bf16.msra.mxu0 0
        %720 = vmatprep.subr.bf16.mxu0 0
        %721 = vmatpush2.bf16.msra.mxu0 0
        %722 = vmatprep.subr.bf16.mxu0 0
        %723 = vmatpush2.bf16.msra.mxu0 0
        %724 = vmatprep.subr.bf16.mxu0 0
        %725 = vmatpush2.bf16.msra.mxu0 0
        %726 = vmatprep.subr.bf16.mxu0 0
        %727 = vmatpush2.bf16.msra.mxu0 0
        %728 = vmatprep.subr.bf16.mxu0 0
        %729 = vmatpush2.bf16.msra.mxu0 0
        %730 = vmatprep.subr.bf16.mxu0 0
        %731 = vmatpush2.bf16.msra.mxu0 0
        %732 = vmatprep.mubr.bf16.mxu0 0
        %733 = vmatmul.mubr.bf16.gmra.mxu0 %v698
        %v734 = vpop.f32.mrf.mxu0
        %v735 = vadd.f32 %v581, %v734
        %v736 = vpop.f32.mrf.mxu0
        %v737 = vpop.f32.mrf.mxu0
        %v738 = vadd.f32 %v581, %v737
        %v739 = vpop.f32.mrf.mxu0
        %740 = vdwg.mxu0
        %v741 = vmul.f32 %v735, %v735
        %v742 = vmul.f32 %v738, %v738
        %v743 = vmul.f32 %v735, %v741
        %v744 = vmul.f32 %v738, %v742
        %v745 = vmul.f32 %v743, 0.044715
        %v746 = vmul.f32 %v744, 0.044715
        %v747 = vadd.f32 %v735, %v745
        %v748 = vadd.f32 %v738, %v746
        %v749 = vmul.f32 %v747, 0.7978846
        %v750 = vmul.f32 %v748, 0.7978846
        %v751 = vtanh.pop %v749
        %v752 = vtanh.pop %v750
        %v753 = vadd.f32 %v751, 1.0
        %v754 = vadd.f32 %v752, 1.0
        %v755 = vmul.f32 %v753, 0.5
        %v756 = vmul.f32 %v754, 0.5
        %v757 = vmul.f32 %v735, %v755
        %v758 = vmul.f32 %v738, %v756
        %761 = vrot.lane.b32.xlu0 %v757, 96
        %v762 = vpop.permute.xlu0 %761
        %763 = vrot.lane.b32.xlu0 %v758, 96
        %v764 = vpop.permute.xlu0 %763
        %v767 = vsel %vm595, %v762, 0.0
        %768 = vadd.xlane.f32.xlu0 %v767
        %v769 = vpop.xlane.xlu0 %768
        %v770 = vsel %vm595, %v764, 0.0
        %771 = vadd.xlane.f32.xlu0 %v770
        %v772 = vpop.xlane.xlu0 %771
        %v773 = vmul.f32 %v769, %v655
        %v774 = vmul.f32 %v772, %v655
        %v775 = vsub.f32 %v757, %v773
        %v776 = vsub.f32 %v758, %v774
        %v777 = vmul.f32 %v775, %v775
        %v778 = vmul.f32 %v776, %v776
        %781 = vrot.lane.b32.xlu0 %v777, 96
        %v782 = vpop.permute.xlu0 %781
        %783 = vrot.lane.b32.xlu0 %v778, 96
        %v784 = vpop.permute.xlu0 %783
        %v787 = vsel %vm595, %v782, 0.0
        %788 = vadd.xlane.f32.xlu0 %v787
        %v789 = vpop.xlane.xlu0 %788
        %v790 = vsel %vm595, %v784, 0.0
        %791 = vadd.xlane.f32.xlu0 %v790
        %v792 = vpop.xlane.xlu0 %791
        %v793 = vmul.f32 %v789, %v655
        %v794 = vmul.f32 %v792, %v655
        %v795 = vadd.f32 %v793, 1e-05
        %v796 = vadd.f32 %v794, 1e-05
        %v797 = vrsqrt.pop %v795
        %v798 = vrsqrt.pop %v796
        %v799 = vmul.f32 %v775, %v797
        %v800 = vmul.f32 %v776, %v798
        %v801 = vmul.f32 %v799, %v677
        %v802 = vmul.f32 %v800, %v677
        %v803 = vadd.f32 %v801, %v687
        %v804 = vadd.f32 %v802, %v687
        %p805 = scmp.gt.s32.totalorder %s40, 0
        %s806 = scalar_select %p805, 1, 0
        %v807 = vstv %s806
        %vm808 = vcmp.eq.s32.totalorder %v807, 1
        %v809 = vsel %vm808, %v803, 0.0
        %v810 = vlaneseq
        %v811 = vshrl.u32 %v810, 7
        %s812 = sadd.s32 %s570, 8
        %v813 = vstv %s812
        %v814 = vadd.s32 %v813, %v811
        %vm815 = vcmp.lt.s32.totalorder %v814, 8
        %v816 = vsel %vm815, 1, 0
        %vm817 = vcmp.eq.s32.totalorder %v816, 1
        %v818 = vsel %vm817, %v804, 0.0
        %v820 = vrot.slane %v689, 7
        %v823 = vrot.slane %v818, 7
        %vm825 = vcmask 1040384
        %v826 = vsel %vm825, %v809, %v820
        %v827 = vsel %vm825, %v820, %v823
        %v828 = vld [vmem:[#allocation10] sm:$0x1]
        %v829 = vlaneseq
        %v830 = vshrl.u32 %v829, 7
        %v831 = vsub.s32 0, %v830
        %v832 = vrot.slane %v828, %v831
        %834 = vrot.lane.b32.xlu0 %v832, 32
        %v835 = vpop.permute.xlu0 %834
        %v837 = vmul.f32 %v826, %v835
        %v838 = vld [vmem:[#allocation10 + $0x1] sm:$0x1]
        %v839 = vlaneseq
        %v840 = vshrl.u32 %v839, 7
        %v841 = vsub.s32 0, %v840
        %v842 = vrot.slane %v838, %v841
        %844 = vrot.lane.b32.xlu0 %v842, 32
        %v845 = vpop.permute.xlu0 %844
        %v847 = vmul.f32 %v826, %v845
        %v848 = vmul.f32 %v827, %v845
        %vm851 = vcmask 1046528
        %v852 = vrot.slane %v847, 1
        %v853 = vrot.slane %v848, 1
        %v854 = vsel %vm851, %v852, %v853
        %v856 = vadd.f32 %v837, %v854
        %v857 = vld [vmem:[#allocation10 + $0x2] sm:$0x1]
        %v858 = vlaneseq
        %v859 = vshrl.u32 %v858, 7
        %v860 = vsub.s32 0, %v859
        %v861 = vrot.slane %v857, %v860
        %863 = vrot.lane.b32.xlu0 %v861, 32
        %v864 = vpop.permute.xlu0 %863
        %v866 = vmul.f32 %v826, %v864
        %v867 = vmul.f32 %v827, %v864
        %vm870 = vcmask 1045504
        %v871 = vrot.slane %v866, 2
        %v872 = vrot.slane %v867, 2
        %v873 = vsel %vm870, %v871, %v872
        %v875 = vadd.f32 %v856, %v873
        %v876 = vld [vmem:[#allocation11] sm:$0x1]
        %v878 = vlaneseq
        %v879 = vshrl.u32 %v878, 7
        %v880 = vsub.s32 0, %v879
        %v881 = vrot.slane %v876, %v880
        %882 = vrot.lane.b32.xlu0 %v881, 32
        %v883 = vpop.permute.xlu0 %882
        %v885 = vadd.f32 %v875, %v883
        %v886 = vpack.c.bf16 %v885, %v885
        %v887 = vld [vmem:[#allocation13] sm:$0xf]
        %v888 = vld [vmem:[#allocation13 + $0x4] sm:$0xf]
        %v889 = vld [vmem:[#allocation13 + $0x8] sm:$0xf]
        %v890 = vld [vmem:[#allocation13 + $0xc] sm:$0xf]
        %v891 = vld [vmem:[#allocation14] sm:$0x1]
        %v893 = vlaneseq
        %v894 = vshrl.u32 %v893, 7
        %v895 = vsub.s32 0, %v894
        %v896 = vrot.slane %v891, %v895
        %899 = vrot.lane.b32.xlu0 %v886, 96
        %v900 = vpop.permute.xlu0 %899
        %v905 = vunpack.c.l.b16 %v887
        %v906 = vunpack.c.l.b16 %v888
        %v907 = vunpack.c.l.b16 %v889
        %v908 = vunpack.c.l.b16 %v890
        %v909 = vpack.c.b16 %v906, %v905
        %v910 = vpack.c.b16 %v908, %v907
        %v914 = vsel %vm595, %v900, 0
        %916 = vmatprep.subr.bf16.mxu0 0
        %917 = vmatpush1.bf16.msra.mxu0 0
        %918 = vmatprep.subr.bf16.mxu0 0
        %919 = vmatpush1.bf16.msra.mxu0 0
        %920 = vmatprep.subr.bf16.mxu0 0
        %921 = vmatpush1.bf16.msra.mxu0 0
        %922 = vmatprep.subr.bf16.mxu0 0
        %923 = vmatpush1.bf16.msra.mxu0 0
        %924 = vmatprep.subr.bf16.mxu0 0
        %925 = vmatpush1.bf16.msra.mxu0 0
        %926 = vmatprep.subr.bf16.mxu0 0
        %927 = vmatpush1.bf16.msra.mxu0 0
        %928 = vmatprep.subr.bf16.mxu0 0
        %929 = vmatpush1.bf16.msra.mxu0 %v910
        %930 = vmatprep.subr.bf16.mxu0 0
        %931 = vmatpush1.bf16.msra.mxu0 %v909
        %932 = vmatprep.subr.bf16.mxu0 0
        %933 = vmatpush2.bf16.msra.mxu0 0
        %934 = vmatprep.subr.bf16.mxu0 0
        %935 = vmatpush2.bf16.msra.mxu0 0
        %936 = vmatprep.subr.bf16.mxu0 0
        %937 = vmatpush2.bf16.msra.mxu0 0
        %938 = vmatprep.subr.bf16.mxu0 0
        %939 = vmatpush2.bf16.msra.mxu0 0
        %940 = vmatprep.subr.bf16.mxu0 0
        %941 = vmatpush2.bf16.msra.mxu0 0
        %942 = vmatprep.subr.bf16.mxu0 0
        %943 = vmatpush2.bf16.msra.mxu0 0
        %944 = vmatprep.subr.bf16.mxu0 0
        %945 = vmatpush2.bf16.msra.mxu0 0
        %946 = vmatprep.subr.bf16.mxu0 0
        %947 = vmatpush2.bf16.msra.mxu0 0
        %948 = vmatprep.mubr.bf16.mxu0 0
        %949 = vmatmul.mubr.bf16.gmra.mxu0 %v914
        %v950 = vpop.f32.mrf.mxu0
        %v951 = vadd.f32 %v896, %v950
        %v952 = vpop.f32.mrf.mxu0
        %v953 = vpop.f32.mrf.mxu0
        %v954 = vpop.f32.mrf.mxu0
        %955 = vdwg.mxu0
        %v956 = vmul.f32 %v647, %v951
        %v957 = vpack.c.bf16 %v956, %v956
        %v958 = vld [vmem:[%s10] sm:$0xf]
        %v959 = vld [vmem:[%s10 + $0x4] sm:$0xf]
        %v960 = vld [vmem:[%s10 + $0x8] sm:$0xf]
        %v961 = vld [vmem:[%s10 + $0xc] sm:$0xf]
        %v962 = vld [vmem:[%s11] sm:$0x1]
        %v964 = vlaneseq
        %v965 = vshrl.u32 %v964, 7
        %v966 = vsub.s32 0, %v965
        %v967 = vrot.slane %v962, %v966
        %v973 = vunpack.c.l.b16 %v958
        %v974 = vunpack.c.l.b16 %v959
        %v975 = vunpack.c.l.b16 %v960
        %v976 = vunpack.c.l.b16 %v961
        %v977 = vpack.c.b16 %v974, %v973
        %v978 = vpack.c.b16 %v976, %v975
        %v982 = vsel %vm595, %v957, 0
        %984 = vmatprep.subr.bf16.mxu0 0
        %985 = vmatpush1.bf16.msra.mxu0 0
        %986 = vmatprep.subr.bf16.mxu0 0
        %987 = vmatpush1.bf16.msra.mxu0 0
        %988 = vmatprep.subr.bf16.mxu0 0
        %989 = vmatpush1.bf16.msra.mxu0 0
        %990 = vmatprep.subr.bf16.mxu0 0
        %991 = vmatpush1.bf16.msra.mxu0 0
        %992 = vmatprep.subr.bf16.mxu0 0
        %993 = vmatpush1.bf16.msra.mxu0 0
        %994 = vmatprep.subr.bf16.mxu0 0
        %995 = vmatpush1.bf16.msra.mxu0 0
        %996 = vmatprep.subr.bf16.mxu0 0
        %997 = vmatpush1.bf16.msra.mxu0 %v978
        %998 = vmatprep.subr.bf16.mxu0 0
        %999 = vmatpush1.bf16.msra.mxu0 %v977
        %1000 = vmatprep.subr.bf16.mxu0 0
        %1001 = vmatpush2.bf16.msra.mxu0 0
        %1002 = vmatprep.subr.bf16.mxu0 0
        %1003 = vmatpush2.bf16.msra.mxu0 0
        %1004 = vmatprep.subr.bf16.mxu0 0
        %1005 = vmatpush2.bf16.msra.mxu0 0
        %1006 = vmatprep.subr.bf16.mxu0 0
        %1007 = vmatpush2.bf16.msra.mxu0 0
        %1008 = vmatprep.subr.bf16.mxu0 0
        %1009 = vmatpush2.bf16.msra.mxu0 0
        %1010 = vmatprep.subr.bf16.mxu0 0
        %1011 = vmatpush2.bf16.msra.mxu0 0
        %1012 = vmatprep.subr.bf16.mxu0 0
        %1013 = vmatpush2.bf16.msra.mxu0 0
        %1014 = vmatprep.subr.bf16.mxu0 0
        %1015 = vmatpush2.bf16.msra.mxu0 0
        %1016 = vmatprep.mubr.bf16.mxu0 0
        %1017 = vmatmul.mubr.bf16.gmra.mxu0 %v982
        %v1018 = vpop.f32.mrf.mxu0
        %v1019 = vadd.f32 %v967, %v1018
        %v1020 = vpop.f32.mrf.mxu0
        %v1021 = vpop.f32.mrf.mxu0
        %v1022 = vpop.f32.mrf.mxu0
        %1023 = vdwg.mxu0
        %1024 = vst.msk [vmem:[%s568] sm:$0xff] %vm595, %v1019
        %s1025 = sand.u32 %s323, 1
        %s1026 = scalar_lea.sflag [#allocation4], %s1025
        %s1027 = sand.u32 %s323, 1
        %s1028 = smul.addr %s1027, 8
        %s1029 = scalar_lea.vmem [#allocation16], %s1028
        // Predicated region
        $region101: #{tpu_custom_call.1} parent=67 // pred_check
          %p1030 = pneg %p333
        $region102: #{tpu_custom_call.1} parent=67 // pred_check_branch
          %1032 = sbr.rel (%p1030) target = $region104
        $region103: #{tpu_custom_call.1} parent=67 // pred_region
          %s1034 = ssub.s32 128, 128
          %1035 = vsyncadd %s1026, %s1034
          %s1036 = sadd.s32 %s40, %s39
          %s1037 = smul.addr %s1036, 128
          %s1038 = scalar_lea.hbm %s12, %s1037
          %s1040 = sshll.u32 %s1029, 4
          %s1041 = int_to_ptr.vmem [resolvable:$true] %s1040
          %1043 = dma.vmem_to_hbm [thread:$0]  %s1041, 128, %s1038, %s1026
        $region104: #{tpu_custom_call.1} parent=67 // pred_fallthru
          _
      $region68: #{tpu_custom_call.1} parent=5 // pred_fallthru
        _
      %p1044 = scmp.le.s32.totalorder 2, %s30
      // Predicated region
      $region105: #{tpu_custom_call.1} parent=5 // pred_check
        %p1045 = pneg %p1044
      $region106: #{tpu_custom_call.1} parent=5 // pred_check_branch
        %1047 = sbr.rel (%p1045) target = $region108
      $region107: #{tpu_custom_call.1} parent=5 // pred_region
        %s1048 = ssub.s32 %s30, 2
        // Predicated region
        $region109: #{tpu_custom_call.1} parent=107 // pred_check
          %p1049 = pneg %p339
        $region110: #{tpu_custom_call.1} parent=107 // pred_check_branch
          %1051 = sbr.rel (%p1049) target = $region112
        $region111: #{tpu_custom_call.1} parent=107 // pred_region
          %s1052 = sand.u32 %s324, 1
          %s1053 = scalar_lea.sflag [#allocation4], %s1052
          %s1054 = sand.u32 %s324, 1
          %s1055 = smul.addr %s1054, 8
          %s1056 = scalar_lea.vmem [#allocation16], %s1055
          %1057 = dma.done %s1053, 128
        $region112: #{tpu_custom_call.1} parent=107 // pred_fallthru
          _
      $region108: #{tpu_custom_call.1} parent=5 // pred_fallthru
        _
    $region6: #{tpu_custom_call.1} parent=1 // loop_footer
      %s34 = sadd.s32 1, %s30
    $region7: #{tpu_custom_call.1} parent=1 // loop_footer_branch
      %29 = sbr.rel target = $region3
    $region8: #{tpu_custom_call.1} parent=1 // loop_exit
      _
    %1058 = vsyncpa [#allocation3], 1
    %s1059 = scalar_lea.sflag [#allocation3], 1
    %1060 = vsyncpa %s1059, 1
    %1061 = vsyncpa [#allocation6], 1
    %s1062 = scalar_lea.sflag [#allocation6], 1
    %1063 = vsyncpa %s1062, 1
    %1064 = vsyncpa [#allocation9], 1
    %1065 = vsyncpa [#allocation12], 1
    %1066 = vsyncpa [#allocation15], 1
    %1067 = vsyncpa [#allocation4], 1
    %s1068 = scalar_lea.sflag [#allocation4], 1
    %1069 = vsyncpa %s1068, 1

</llo_original>
